<compile_context>
chip_gen: v7x
topology: tpu7x:2x2x1
jax: 0.10.0
libtpu: 0.0.40
codegen_flags: <defaults>
</compile_context>

<pallas_src>
import math

import jax
import jax.numpy as jnp
from jax.experimental import pallas as pl
from jax.experimental.pallas import tpu as pltpu


# ----------------------------------------------------------------------------
# Pallas kernel
# ----------------------------------------------------------------------------

def noisy_linear_kernel(x_ref, wt_ref, nwt_ref, b_ref, nb_ref, inn_ref, outn_ref, o_ref):
    """One (tm, tn) output tile of NoisyLinear.

    x_ref:   (tm, K)  bf16
    wt_ref:  (K, tn)  bf16   -- W^T
    nwt_ref: (K, tn)  bf16   -- noisy_W^T
    b_ref / nb_ref / outn_ref: (1, tn) f32
    inn_ref: (1, K)   f32
    """
    x = x_ref[...]
    # normal path: x @ W^T
    y = jnp.dot(x, wt_ref[...], preferred_element_type=jnp.float32)
    # noisy path (factorized): (x * in_noise) @ noisy_W^T, scaled by out_noise
    xn = (x.astype(jnp.float32) * inn_ref[...]).astype(jnp.bfloat16)
    yn = jnp.dot(xn, nwt_ref[...], preferred_element_type=jnp.float32)
    out = y + b_ref[...] + (yn + nb_ref[...]) * outn_ref[...]
    o_ref[...] = out.astype(o_ref.dtype)


# ----------------------------------------------------------------------------
# Wrapper
# ----------------------------------------------------------------------------

def _round_up(v, m):
    return (v + m - 1) // m * m


def noisy_linear(x, weight, bias, noisy_weight, noisy_bias, in_noise, out_noise,
                 *, tile_m=128, tile_n=128):
    """x: (..., In). weight/noisy_weight: (Out, In) in PyTorch layout."""
    out_features, in_features = weight.shape
    lead = x.shape[:-1]
    x2 = x.reshape(-1, in_features)
    M = x2.shape[0]

    tm = min(tile_m, _round_up(M, 8))
    tn = min(tile_n, _round_up(out_features, 128))
    Mp = _round_up(M, tm)
    Np = _round_up(out_features, tn)

    # Pad + cast GEMM operands to bf16 (f32 accumulate inside the kernel).
    xp = jnp.pad(x2, ((0, Mp - M), (0, 0))).astype(jnp.bfloat16)
    wt = jnp.pad(weight.T, ((0, 0), (0, Np - out_features))).astype(jnp.bfloat16)
    nwt = jnp.pad(noisy_weight.T, ((0, 0), (0, Np - out_features))).astype(jnp.bfloat16)
    b = jnp.pad(bias, (0, Np - out_features)).reshape(1, Np).astype(jnp.float32)
    nb = jnp.pad(noisy_bias, (0, Np - out_features)).reshape(1, Np).astype(jnp.float32)
    inn = in_noise.reshape(1, in_features).astype(jnp.float32)
    outn = jnp.pad(out_noise, (0, Np - out_features)).reshape(1, Np).astype(jnp.float32)

    grid = (Mp // tm, Np // tn)
    out = pl.pallas_call(
        noisy_linear_kernel,
        out_shape=jax.ShapeDtypeStruct((Mp, Np), jnp.float32),
        grid=grid,
        in_specs=[
            pl.BlockSpec((tm, in_features), lambda i, j: (i, 0)),   # x tile
            pl.BlockSpec((in_features, tn), lambda i, j: (0, j)),   # W^T tile
            pl.BlockSpec((in_features, tn), lambda i, j: (0, j)),   # noisy_W^T tile
            pl.BlockSpec((1, tn), lambda i, j: (0, j)),             # bias
            pl.BlockSpec((1, tn), lambda i, j: (0, j)),             # noisy bias
            pl.BlockSpec((1, in_features), lambda i, j: (0, 0)),    # in_noise
            pl.BlockSpec((1, tn), lambda i, j: (0, j)),             # out_noise
        ],
        out_specs=pl.BlockSpec((tm, tn), lambda i, j: (i, j)),
        compiler_params=pltpu.CompilerParams(
            dimension_semantics=("parallel", "parallel")),
    )(xp, wt, nwt, b, nb, inn, outn)

    return out[:M, :out_features].reshape(*lead, out_features)


# ----------------------------------------------------------------------------
# Parameter init / noise sampling (matches reset_parameters / sample_noise)
# ----------------------------------------------------------------------------

def init_noisy_linear_params(key, in_features, out_features):
    stdv = 1.0 / math.sqrt(in_features)
    ks = jax.random.split(key, 4)
    weight = jax.random.uniform(ks[0], (out_features, in_features), jnp.float32, -stdv, stdv)
    noisy_weight = jax.random.uniform(ks[1], (out_features, in_features), jnp.float32, -stdv, stdv)
    bias = jax.random.uniform(ks[2], (out_features,), jnp.float32, -stdv, stdv)
    noisy_bias = jax.random.uniform(ks[3], (out_features,), jnp.float32, -stdv, stdv)
    return weight, bias, noisy_weight, noisy_bias


def sample_noise(key, in_features, out_features, sigma0=0.5):
    noise_std = sigma0 / math.sqrt(in_features)
    k1, k2 = jax.random.split(key)
    in_noise = jax.random.normal(k1, (in_features,), jnp.float32) * noise_std
    out_noise = jax.random.normal(k2, (out_features,), jnp.float32) * noise_std
    return in_noise, out_noise


def noisy_linear_ref(x, weight, bias, noisy_weight, noisy_bias, in_noise, out_noise):
    """Pure-JAX f32 reference matching the PyTorch forward exactly."""
    noise = jnp.outer(out_noise, in_noise)
    normal_y = x @ weight.T + bias
    noisy_y = x @ (noisy_weight * noise).T + noisy_bias * out_noise
    return normal_y + noisy_y


# ----------------------------------------------------------------------------
# Main
# ----------------------------------------------------------------------------

if __name__ == "__main__":
    key = jax.random.PRNGKey(0)
    k_param, k_noise, k_x = jax.random.split(key, 3)

    IN_FEATURES = 384
    OUT_FEATURES = 256
    BATCH = 256

    weight, bias, noisy_weight, noisy_bias = init_noisy_linear_params(
        k_param, IN_FEATURES, OUT_FEATURES)
    in_noise, out_noise = sample_noise(k_noise, IN_FEATURES, OUT_FEATURES)
    x = jax.random.normal(k_x, (BATCH, IN_FEATURES), jnp.float32)

    out = noisy_linear(x, weight, bias, noisy_weight, noisy_bias, in_noise, out_noise)
    jax.block_until_ready(out)

    ref = noisy_linear_ref(x, weight, bias, noisy_weight, noisy_bias, in_noise, out_noise)
    assert out.shape == (BATCH, OUT_FEATURES)
    max_err = float(jnp.max(jnp.abs(out - ref)))
    scale = float(jnp.max(jnp.abs(ref))) + 1e-6
    assert max_err / scale < 2e-2, (max_err, scale)   # bf16-operand / f32-accum tolerance

    print("KERNEL_OK")
</pallas_src>

<mosaic_0001>
module attributes {stable_mosaic.version = 11 : i64} {
  func.func @noisy_linear_kernel(%arg0: i32, %arg1: i32, %arg2: memref<128x384xbf16, #tpu.memory_space<vmem>>, %arg3: memref<384x128xbf16, #tpu.memory_space<vmem>>, %arg4: memref<384x128xbf16, #tpu.memory_space<vmem>>, %arg5: memref<1x128xf32, #tpu.memory_space<vmem>>, %arg6: memref<1x128xf32, #tpu.memory_space<vmem>>, %arg7: memref<1x384xf32, #tpu.memory_space<vmem>>, %arg8: memref<1x128xf32, #tpu.memory_space<vmem>>, %arg9: memref<128x128xf32, #tpu.memory_space<vmem>>) attributes {dimension_semantics = [#tpu.dimension_semantics<parallel>, #tpu.dimension_semantics<parallel>], iteration_bounds = array<i64: 2, 2>, scalar_prefetch = 0 : i64, scratch_operands = 0 : i64, tpu.core_type = #tpu.core_type<tc>, window_params = [{transform_indices = @transform_0, window_bounds = array<i64: 128, 384>}, {transform_indices = @transform_1, window_bounds = array<i64: 384, 128>}, {transform_indices = @transform_2, window_bounds = array<i64: 384, 128>}, {transform_indices = @transform_3, window_bounds = array<i64: 1, 128>}, {transform_indices = @transform_4, window_bounds = array<i64: 1, 128>}, {pipeline_mode = #tpu.pipeline_mode<synchronous>, transform_indices = @transform_5, window_bounds = array<i64: 1, 384>}, {transform_indices = @transform_6, window_bounds = array<i64: 1, 128>}, {transform_indices = @transform_7, window_bounds = array<i64: 128, 128>}]} {
    %c0 = arith.constant 0 : index
    %c0_0 = arith.constant 0 : index
    %0 = vector.load %arg2[%c0, %c0_0] : memref<128x384xbf16, #tpu.memory_space<vmem>>, vector<128x384xbf16>
    %c0_1 = arith.constant 0 : index
    %c0_2 = arith.constant 0 : index
    %1 = vector.load %arg3[%c0_1, %c0_2] : memref<384x128xbf16, #tpu.memory_space<vmem>>, vector<384x128xbf16>
    %cst = arith.constant dense<0.000000e+00> : vector<128x128xf32>
    %2 = tpu.matmul %0, %1, %cst {dimension_numbers = #tpu.dot_dimension_numbers<[1], [0], [0], [1], [0, 0, 1, 1], [], []>} : vector<128x384xbf16>, vector<384x128xbf16>, vector<128x128xf32> -> vector<128x128xf32>
    %3 = arith.extf %0 : vector<128x384xbf16> to vector<128x384xf32>
    %c0_3 = arith.constant 0 : index
    %c0_4 = arith.constant 0 : index
    %4 = vector.load %arg7[%c0_3, %c0_4] : memref<1x384xf32, #tpu.memory_space<vmem>>, vector<1x384xf32>
    %5 = vector.broadcast %4 : vector<1x384xf32> to vector<128x384xf32>
    %6 = arith.mulf %3, %5 : vector<128x384xf32>
    %7 = arith.truncf %6 : vector<128x384xf32> to vector<128x384xbf16>
    %c0_5 = arith.constant 0 : index
    %c0_6 = arith.constant 0 : index
    %8 = vector.load %arg4[%c0_5, %c0_6] : memref<384x128xbf16, #tpu.memory_space<vmem>>, vector<384x128xbf16>
    %cst_7 = arith.constant dense<0.000000e+00> : vector<128x128xf32>
    %9 = tpu.matmul %7, %8, %cst_7 {dimension_numbers = #tpu.dot_dimension_numbers<[1], [0], [0], [1], [0, 0, 1, 1], [], []>} : vector<128x384xbf16>, vector<384x128xbf16>, vector<128x128xf32> -> vector<128x128xf32>
    %c0_8 = arith.constant 0 : index
    %c0_9 = arith.constant 0 : index
    %10 = vector.load %arg5[%c0_8, %c0_9] : memref<1x128xf32, #tpu.memory_space<vmem>>, vector<1x128xf32>
    %11 = vector.broadcast %10 : vector<1x128xf32> to vector<128x128xf32>
    %12 = arith.addf %2, %11 : vector<128x128xf32>
    %c0_10 = arith.constant 0 : index
    %c0_11 = arith.constant 0 : index
    %13 = vector.load %arg6[%c0_10, %c0_11] : memref<1x128xf32, #tpu.memory_space<vmem>>, vector<1x128xf32>
    %14 = vector.broadcast %13 : vector<1x128xf32> to vector<128x128xf32>
    %15 = arith.addf %9, %14 : vector<128x128xf32>
    %c0_12 = arith.constant 0 : index
    %c0_13 = arith.constant 0 : index
    %16 = vector.load %arg8[%c0_12, %c0_13] : memref<1x128xf32, #tpu.memory_space<vmem>>, vector<1x128xf32>
    %17 = vector.broadcast %16 : vector<1x128xf32> to vector<128x128xf32>
    %18 = arith.mulf %15, %17 : vector<128x128xf32>
    %19 = arith.addf %12, %18 : vector<128x128xf32>
    %c0_14 = arith.constant 0 : index
    %c0_15 = arith.constant 0 : index
    %20 = vector.load %arg9[%c0_14, %c0_15] : memref<128x128xf32, #tpu.memory_space<vmem>>, vector<128x128xf32>
    tpu.vector_store %arg9[%c0_14, %c0_15], %19 {strides = array<i32>} : memref<128x128xf32, #tpu.memory_space<vmem>>, vector<128x128xf32>,
    return
  }
  func.func @transform_0(%arg0: i32, %arg1: i32) -> (i32, i32) {
    %c0_i32 = arith.constant 0 : i32
    %c0_i32_0 = arith.constant 0 : i32
    return %arg0, %c0_i32 : i32, i32
  }
  func.func @transform_1(%arg0: i32, %arg1: i32) -> (i32, i32) {
    %c0_i32 = arith.constant 0 : i32
    %c0_i32_0 = arith.constant 0 : i32
    return %c0_i32, %arg1 : i32, i32
  }
  func.func @transform_2(%arg0: i32, %arg1: i32) -> (i32, i32) {
    %c0_i32 = arith.constant 0 : i32
    %c0_i32_0 = arith.constant 0 : i32
    return %c0_i32, %arg1 : i32, i32
  }
  func.func @transform_3(%arg0: i32, %arg1: i32) -> (i32, i32) {
    %c0_i32 = arith.constant 0 : i32
    %c0_i32_0 = arith.constant 0 : i32
    return %c0_i32, %arg1 : i32, i32
  }
  func.func @transform_4(%arg0: i32, %arg1: i32) -> (i32, i32) {
    %c0_i32 = arith.constant 0 : i32
    %c0_i32_0 = arith.constant 0 : i32
    return %c0_i32, %arg1 : i32, i32
  }
  func.func @transform_5(%arg0: i32, %arg1: i32) -> (i32, i32) {
    %c0_i32 = arith.constant 0 : i32
    %c0_i32_0 = arith.constant 0 : i32
    %c0_i32_1 = arith.constant 0 : i32
    return %c0_i32, %c0_i32_0 : i32, i32
  }
  func.func @transform_6(%arg0: i32, %arg1: i32) -> (i32, i32) {
    %c0_i32 = arith.constant 0 : i32
    %c0_i32_0 = arith.constant 0 : i32
    return %c0_i32, %arg1 : i32, i32
  }
  func.func @transform_7(%arg0: i32, %arg1: i32) -> (i32, i32) {
    %c0_i32 = arith.constant 0 : i32
    return %arg0, %arg1 : i32, i32
  }
}

</mosaic_0001>

<llo_original>
// kernel: tpu_custom_call.1
$region0: #{tpu_custom_call.1}
  #allocation0 [shape = 'u32[]', space=smem, size = 0x4, offset = 0x4, fixed_abs, tag = 'smem constant byte address 0x4 - core index']
  #allocation1 [shape = 'u32[144,128]{1,0:T(1,128)}', space=vmem, size = 0x12000, scoped, tag = 'internal scratch']
  %s0 = inlined_call_operand.hbm [shape: bf16[256,384], index: 0, kind: input, shape index: {}]
  %s1 = inlined_call_operand.hbm [shape: bf16[384,256], index: 1, kind: input, shape index: {}]
  %s2 = inlined_call_operand.hbm [shape: bf16[384,256], index: 2, kind: input, shape index: {}]
  %s3 = inlined_call_operand.vmem [shape: f32[1,256], index: 3, kind: input, shape index: {}]
  %s4 = inlined_call_operand.vmem [shape: f32[1,256], index: 4, kind: input, shape index: {}]
  %s5 = inlined_call_operand.vmem [shape: f32[1,384], index: 5, kind: input, shape index: {}]
  %s6 = inlined_call_operand.vmem [shape: f32[1,256], index: 6, kind: input, shape index: {}]
  %s7 = inlined_call_operand.hbm [shape: f32[256,256], index: 7, kind: output, shape index: {}]
  %s8 = sld [smem:[#allocation0]]
  $region73: #{tpu_custom_call.1} parent=0
    _
  %s10 = ssub.s32 1, %s8
  %s11 = scalar_select 0, %s10, %s8
  $region1: #{tpu_custom_call.1} parent=0
    #allocation2 [shape = 'u8[196608]{0}', space=vmem, size = 0x30000, scoped, tag = 'input window, operand 0']
    #allocation3 [shape = 's32[2]{0}', space=sflag, size = 0x8, scoped, tag = 'scoped memory for tpu_custom_call.1']
    #allocation4 [shape = 's32[2]{0}', space=sflag, size = 0x8, scoped, tag = 'scoped memory for tpu_custom_call.1']
    #allocation5 [shape = 'u8[196608]{0}', space=vmem, size = 0x30000, scoped, tag = 'input window, operand 1']
    #allocation6 [shape = 's32[2]{0}', space=sflag, size = 0x8, scoped, tag = 'scoped memory for tpu_custom_call.1']
    #allocation7 [shape = 'u8[196608]{0}', space=vmem, size = 0x30000, scoped, tag = 'input window, operand 2']
    #allocation8 [shape = 'u8[131072]{0}', space=vmem, size = 0x20000, scoped, tag = 'output window, operand 0']
    %12 = vsyncpa [#allocation3], 0
    %s13 = scalar_lea.sflag [#allocation3], 1
    %14 = vsyncpa %s13, 0
    %15 = vsyncpa [#allocation6], 0
    %s16 = scalar_lea.sflag [#allocation6], 1
    %17 = vsyncpa %s16, 0
    %18 = vsyncpa [#allocation4], 0
    %s19 = scalar_lea.sflag [#allocation4], 1
    %20 = vsyncpa %s19, 0
    loop: start=0, step=1, limit=6
    $region2: #{tpu_custom_call.1} parent=1 // loop_pre_header
      _
    $region3: #{tpu_custom_call.1} parent=1 // loop_header
      %s22 = sphi 0, %s26
      %p23 = scmp.ge.s32.totalorder %s22, 6
      %s29 = sphi 0, %s41
      %s30 = sphi 0, %s37
      %s31 = sphi 0, %s29
      %s32 = sphi 0, %s30
      %s33 = sphi 0, %s31
      %s34 = sphi 0, %s32
      %s44 = sphi 0, %s46
      %s47 = sphi 0, %s44
      %s48 = sphi 0, %s47
      %s64 = sphi 0, %s48
      %s70 = sphi 0, %s72
      %s73 = sphi 0, %s70
      %s74 = sphi 0, %s73
      %s90 = sphi 0, %s74
      %s96 = sphi 0, %s98
      %s99 = sphi 0, %s96
      %s100 = sphi 0, %s99
      %s116 = sphi 0, %s100
      %s122 = sphi 0, %s124
      %s125 = sphi 0, %s122
      %s126 = sphi 0, %s125
      %s142 = sphi 0, %s126
      %s148 = sphi 0, %s150
      %s151 = sphi 0, %s148
      %s152 = sphi 0, %s151
      %s168 = sphi 0, %s152
      %s172 = sphi 0, %s172
      %s174 = sphi 0, %s172
      %s175 = sphi 0, %s174
      %s189 = sphi 0, %s175
      %s195 = sphi 0, %s197
      %s198 = sphi 0, %s195
      %s199 = sphi 0, %s198
      %s215 = sphi 0, %s199
      %s223 = sphi 0, %s225
      %s226 = sphi 0, %s223
      %s227 = sphi 0, %s226
      %s243 = sphi 0, %s227
    $region4: #{tpu_custom_call.1} parent=1 // loop_header_branch
      %25 = sbr.rel (%p23) target = $region8
    $region5: #{tpu_custom_call.1} parent=1 // loop_body
      %s27 = ssub.s32 %s22, 1
      %s28 = ssub.s32 %s22, 2
      %s35 = sadd.s32 1, %s30
      %p36 = scmp.ge.s32.totalorder %s35, 2
      %s37 = scalar_select %p36, 0, %s35
      %s38 = sadd.s32 1, %s29
      %s39 = scalar_select %p36, %s38, %s29
      %p40 = scmp.ge.s32.totalorder %s39, 2
      %s41 = scalar_select %p40, 0, %s39
      %s42 = ssub.s32 %s29, %s41
      %p43 = scmp.eq.s32.totalorder %s42, 0
      %s45 = sadd.s32 %s44, 1
      %s46 = scalar_select %p43, %s44, %s45
      %p49 = pneg %p43
      %p50 = scmp.eq.s32.totalorder %s22, 3
      %p51 = por %p49, %p50
      %p52 = scmp.ne.s32.totalorder %s44, %s47
      %p53 = scmp.eq.s32.totalorder %s22, 0
      %p54 = por %p52, %p53
      %p55 = scmp.ne.s32.totalorder %s44, %s47
      %p56 = scmp.eq.s32.totalorder %s27, 3
      %p57 = por %p55, %p56
      %p58 = scmp.ne.s32.totalorder %s47, %s48
      %p59 = scmp.eq.s32.totalorder %s27, 0
      %p60 = por %p58, %p59
      %p61 = scmp.ne.s32.totalorder %s47, %s48
      %p62 = scmp.eq.s32.totalorder %s28, 3
      %p63 = por %p61, %p62
      %p65 = scmp.ne.s32.totalorder %s48, %s64
      %p66 = scmp.eq.s32.totalorder %s28, 0
      %p67 = por %p65, %p66
      %s68 = ssub.s32 %s30, %s37
      %p69 = scmp.eq.s32.totalorder %s68, 0
      %s71 = sadd.s32 %s70, 1
      %s72 = scalar_select %p69, %s70, %s71
      %p75 = pneg %p69
      %p76 = scmp.eq.s32.totalorder %s22, 3
      %p77 = por %p75, %p76
      %p78 = scmp.ne.s32.totalorder %s70, %s73
      %p79 = scmp.eq.s32.totalorder %s22, 0
      %p80 = por %p78, %p79
      %p81 = scmp.ne.s32.totalorder %s70, %s73
      %p82 = scmp.eq.s32.totalorder %s27, 3
      %p83 = por %p81, %p82
      %p84 = scmp.ne.s32.totalorder %s73, %s74
      %p85 = scmp.eq.s32.totalorder %s27, 0
      %p86 = por %p84, %p85
      %p87 = scmp.ne.s32.totalorder %s73, %s74
      %p88 = scmp.eq.s32.totalorder %s28, 3
      %p89 = por %p87, %p88
      %p91 = scmp.ne.s32.totalorder %s74, %s90
      %p92 = scmp.eq.s32.totalorder %s28, 0
      %p93 = por %p91, %p92
      %s94 = ssub.s32 %s30, %s37
      %p95 = scmp.eq.s32.totalorder %s94, 0
      %s97 = sadd.s32 %s96, 1
      %s98 = scalar_select %p95, %s96, %s97
      %p101 = pneg %p95
      %p102 = scmp.eq.s32.totalorder %s22, 3
      %p103 = por %p101, %p102
      %p104 = scmp.ne.s32.totalorder %s96, %s99
      %p105 = scmp.eq.s32.totalorder %s22, 0
      %p106 = por %p104, %p105
      %p107 = scmp.ne.s32.totalorder %s96, %s99
      %p108 = scmp.eq.s32.totalorder %s27, 3
      %p109 = por %p107, %p108
      %p110 = scmp.ne.s32.totalorder %s99, %s100
      %p111 = scmp.eq.s32.totalorder %s27, 0
      %p112 = por %p110, %p111
      %p113 = scmp.ne.s32.totalorder %s99, %s100
      %p114 = scmp.eq.s32.totalorder %s28, 3
      %p115 = por %p113, %p114
      %p117 = scmp.ne.s32.totalorder %s100, %s116
      %p118 = scmp.eq.s32.totalorder %s28, 0
      %p119 = por %p117, %p118
      %s120 = ssub.s32 %s30, %s37
      %p121 = scmp.eq.s32.totalorder %s120, 0
      %s123 = sadd.s32 %s122, 1
      %s124 = scalar_select %p121, %s122, %s123
      %p127 = pneg %p121
      %p128 = scmp.eq.s32.totalorder %s22, 3
      %p129 = por %p127, %p128
      %p130 = scmp.ne.s32.totalorder %s122, %s125
      %p131 = scmp.eq.s32.totalorder %s22, 0
      %p132 = por %p130, %p131
      %p133 = scmp.ne.s32.totalorder %s122, %s125
      %p134 = scmp.eq.s32.totalorder %s27, 3
      %p135 = por %p133, %p134
      %p136 = scmp.ne.s32.totalorder %s125, %s126
      %p137 = scmp.eq.s32.totalorder %s27, 0
      %p138 = por %p136, %p137
      %p139 = scmp.ne.s32.totalorder %s125, %s126
      %p140 = scmp.eq.s32.totalorder %s28, 3
      %p141 = por %p139, %p140
      %p143 = scmp.ne.s32.totalorder %s126, %s142
      %p144 = scmp.eq.s32.totalorder %s28, 0
      %p145 = por %p143, %p144
      %s146 = ssub.s32 %s30, %s37
      %p147 = scmp.eq.s32.totalorder %s146, 0
      %s149 = sadd.s32 %s148, 1
      %s150 = scalar_select %p147, %s148, %s149
      %p153 = pneg %p147
      %p154 = scmp.eq.s32.totalorder %s22, 3
      %p155 = por %p153, %p154
      %p156 = scmp.ne.s32.totalorder %s148, %s151
      %p157 = scmp.eq.s32.totalorder %s22, 0
      %p158 = por %p156, %p157
      %p159 = scmp.ne.s32.totalorder %s148, %s151
      %p160 = scmp.eq.s32.totalorder %s27, 3
      %p161 = por %p159, %p160
      %p162 = scmp.ne.s32.totalorder %s151, %s152
      %p163 = scmp.eq.s32.totalorder %s27, 0
      %p164 = por %p162, %p163
      %p165 = scmp.ne.s32.totalorder %s151, %s152
      %p166 = scmp.eq.s32.totalorder %s28, 3
      %p167 = por %p165, %p166
      %p169 = scmp.ne.s32.totalorder %s152, %s168
      %p170 = scmp.eq.s32.totalorder %s28, 0
      %p171 = por %p169, %p170
      %s173 = sadd.s32 %s172, 1
      %p176 = scmp.eq.s32.totalorder %s22, 3
      %p177 = scmp.ne.s32.totalorder %s172, %s174
      %p178 = scmp.eq.s32.totalorder %s22, 0
      %p179 = por %p177, %p178
      %p180 = scmp.ne.s32.totalorder %s172, %s174
      %p181 = scmp.eq.s32.totalorder %s27, 3
      %p182 = por %p180, %p181
      %p183 = scmp.ne.s32.totalorder %s174, %s175
      %p184 = scmp.eq.s32.totalorder %s27, 0
      %p185 = por %p183, %p184
      %p186 = scmp.ne.s32.totalorder %s174, %s175
      %p187 = scmp.eq.s32.totalorder %s28, 3
      %p188 = por %p186, %p187
      %p190 = scmp.ne.s32.totalorder %s175, %s189
      %p191 = scmp.eq.s32.totalorder %s28, 0
      %p192 = por %p190, %p191
      %s193 = ssub.s32 %s30, %s37
      %p194 = scmp.eq.s32.totalorder %s193, 0
      %s196 = sadd.s32 %s195, 1
      %s197 = scalar_select %p194, %s195, %s196
      %p200 = pneg %p194
      %p201 = scmp.eq.s32.totalorder %s22, 3
      %p202 = por %p200, %p201
      %p203 = scmp.ne.s32.totalorder %s195, %s198
      %p204 = scmp.eq.s32.totalorder %s22, 0
      %p205 = por %p203, %p204
      %p206 = scmp.ne.s32.totalorder %s195, %s198
      %p207 = scmp.eq.s32.totalorder %s27, 3
      %p208 = por %p206, %p207
      %p209 = scmp.ne.s32.totalorder %s198, %s199
      %p210 = scmp.eq.s32.totalorder %s27, 0
      %p211 = por %p209, %p210
      %p212 = scmp.ne.s32.totalorder %s198, %s199
      %p213 = scmp.eq.s32.totalorder %s28, 3
      %p214 = por %p212, %p213
      %p216 = scmp.ne.s32.totalorder %s199, %s215
      %p217 = scmp.eq.s32.totalorder %s28, 0
      %p218 = por %p216, %p217
      %s219 = ssub.s32 %s29, %s41
      %s220 = ssub.s32 %s30, %s37
      %s221 = sor.u32 %s219, %s220
      %p222 = scmp.eq.s32.totalorder %s221, 0
      %s224 = sadd.s32 %s223, 1
      %s225 = scalar_select %p222, %s223, %s224
      %p228 = pneg %p222
      %p229 = scmp.eq.s32.totalorder %s22, 3
      %p230 = por %p228, %p229
      %p231 = scmp.ne.s32.totalorder %s223, %s226
      %p232 = scmp.eq.s32.totalorder %s22, 0
      %p233 = por %p231, %p232
      %p234 = scmp.ne.s32.totalorder %s223, %s226
      %p235 = scmp.eq.s32.totalorder %s27, 3
      %p236 = por %p234, %p235
      %p237 = scmp.ne.s32.totalorder %s226, %s227
      %p238 = scmp.eq.s32.totalorder %s27, 0
      %p239 = por %p237, %p238
      %p240 = scmp.ne.s32.totalorder %s226, %s227
      %p241 = scmp.eq.s32.totalorder %s28, 3
      %p242 = por %p240, %p241
      %p244 = scmp.ne.s32.totalorder %s227, %s243
      %p245 = scmp.eq.s32.totalorder %s28, 0
      %p246 = por %p244, %p245
      %p247 = scmp.le.s32.totalorder 1, %s22
      %p248 = scmp.lt.s32.totalorder %s22, 5
      %p249 = pnand %p247, %p248
      %p250 = pneg %p249
      // Predicated region
      $region9: #{tpu_custom_call.1} parent=5 // pred_check
        _
      $region10: #{tpu_custom_call.1} parent=5 // pred_check_branch
        %252 = sbr.rel (%p249) target = $region12
      $region11: #{tpu_custom_call.1} parent=5 // pred_region
        %s253 = ssub.s32 %s22, 1
        // Predicated region
        $region13: #{tpu_custom_call.1} parent=11 // pred_check
          %p254 = pneg %p185
        $region14: #{tpu_custom_call.1} parent=11 // pred_check_branch
          %256 = sbr.rel (%p254) target = $region16
        $region15: #{tpu_custom_call.1} parent=11 // pred_region
          _
        $region16: #{tpu_custom_call.1} parent=11 // pred_fallthru
          _
      $region12: #{tpu_custom_call.1} parent=5 // pred_fallthru
        _
      %p257 = scmp.lt.s32.totalorder %s22, 4
      // Predicated region
      $region17: #{tpu_custom_call.1} parent=5 // pred_check
        %p258 = pneg %p257
      $region18: #{tpu_custom_call.1} parent=5 // pred_check_branch
        %260 = sbr.rel (%p258) target = $region20
      $region19: #{tpu_custom_call.1} parent=5 // pred_region
        // Predicated region
        $region21: #{tpu_custom_call.1} parent=19 // pred_check
          %p261 = pneg %p54
        $region22: #{tpu_custom_call.1} parent=19 // pred_check_branch
          %263 = sbr.rel (%p261) target = $region24
        $region23: #{tpu_custom_call.1} parent=19 // pred_region
          %s264 = sand.u32 %s44, 1
          %s265 = scalar_lea.sflag [#allocation3], %s264
          %s266 = sand.u32 %s44, 1
          %s267 = smul.addr %s266, 192
          %s268 = scalar_lea.vmem [#allocation2], %s267
          %s269 = smul.u32 16, %s29
          %s271 = ssub.s32 3072, 3072
          %272 = vsyncadd %s265, %s271
          %s273 = smul.addr %s269, 3
          %s274 = smul.addr %s273, 64
          %s275 = scalar_lea.hbm %s0, %s274
          %s276 = sshll.u32 %s268, 4
          %s277 = int_to_ptr.vmem [resolvable:$true] %s276
          %282 = dma.hbm_to_vmem [thread:$0]  %s275, 3072, %s277, %s265, 192, 192, 12
        $region24: #{tpu_custom_call.1} parent=19 // pred_fallthru
          _
        // Predicated region
        $region25: #{tpu_custom_call.1} parent=19 // pred_check
          %p283 = pneg %p80
        $region26: #{tpu_custom_call.1} parent=19 // pred_check_branch
          %285 = sbr.rel (%p283) target = $region28
        $region27: #{tpu_custom_call.1} parent=19 // pred_region
          %s286 = sand.u32 %s22, 1
          %s287 = scalar_lea.sflag [#allocation6], %s286
          %s288 = sand.u32 %s70, 1
          %s289 = smul.addr %s288, 192
          %s290 = scalar_lea.vmem [#allocation5], %s289
          %s292 = ssub.s32 3072, 3072
          %293 = vsyncadd %s287, %s292
          %s294 = smul.addr %s30, 64
          %s295 = scalar_lea.hbm %s1, %s294
          %s296 = sshll.u32 %s290, 4
          %s297 = int_to_ptr.vmem [resolvable:$true] %s296
          %302 = dma.hbm_to_vmem [thread:$0]  %s295, 3072, %s297, %s287, 128, 64, 4
        $region28: #{tpu_custom_call.1} parent=19 // pred_fallthru
          _
        // Predicated region
        $region29: #{tpu_custom_call.1} parent=19 // pred_check
          %p303 = pneg %p106
        $region30: #{tpu_custom_call.1} parent=19 // pred_check_branch
          %305 = sbr.rel (%p303) target = $region32
        $region31: #{tpu_custom_call.1} parent=19 // pred_region
          %s306 = sand.u32 %s22, 1
          %s307 = scalar_lea.sflag [#allocation6], %s306
          %s308 = sand.u32 %s96, 1
          %s309 = smul.addr %s308, 192
          %s310 = scalar_lea.vmem [#allocation7], %s309
          %s312 = ssub.s32 3072, 3072
          %313 = vsyncadd %s307, %s312
          %s314 = smul.addr %s30, 64
          %s315 = scalar_lea.hbm %s2, %s314
          %s316 = sshll.u32 %s310, 4
          %s317 = int_to_ptr.vmem [resolvable:$true] %s316
          %322 = dma.hbm_to_vmem [thread:$0]  %s315, 3072, %s317, %s307, 128, 64, 4
        $region32: #{tpu_custom_call.1} parent=19 // pred_fallthru
          _
        // Predicated region
        $region33: #{tpu_custom_call.1} parent=19 // pred_check
          %p323 = pneg %p132
        $region34: #{tpu_custom_call.1} parent=19 // pred_check_branch
          %325 = sbr.rel (%p323) target = $region36
        $region35: #{tpu_custom_call.1} parent=19 // pred_region
          %p326 = scmp.lt.s32.totalorder %s30, 1
          %s327 = scalar_select %p326, %s30, 1
          %s328 = scalar_lea.vmem %s3, %s327
        $region36: #{tpu_custom_call.1} parent=19 // pred_fallthru
          _
        // Predicated region
        $region37: #{tpu_custom_call.1} parent=19 // pred_check
          %p329 = pneg %p158
        $region38: #{tpu_custom_call.1} parent=19 // pred_check_branch
          %331 = sbr.rel (%p329) target = $region40
        $region39: #{tpu_custom_call.1} parent=19 // pred_region
          %p332 = scmp.lt.s32.totalorder %s30, 1
          %s333 = scalar_select %p332, %s30, 1
          %s334 = scalar_lea.vmem %s4, %s333
        $region40: #{tpu_custom_call.1} parent=19 // pred_fallthru
          _
        // Predicated region
        $region41: #{tpu_custom_call.1} parent=19 // pred_check
          %p335 = pneg %p205
        $region42: #{tpu_custom_call.1} parent=19 // pred_check_branch
          %337 = sbr.rel (%p335) target = $region44
        $region43: #{tpu_custom_call.1} parent=19 // pred_region
          %p338 = scmp.lt.s32.totalorder %s30, 1
          %s339 = scalar_select %p338, %s30, 1
          %s340 = scalar_lea.vmem %s6, %s339
        $region44: #{tpu_custom_call.1} parent=19 // pred_fallthru
          _
      $region20: #{tpu_custom_call.1} parent=5 // pred_fallthru
        _
      %p341 = scmp.le.s32.totalorder 1, %s22
      %p342 = scmp.lt.s32.totalorder %s22, 5
      %p343 = pnand %p341, %p342
      %p344 = pneg %p343
      // Predicated region
      $region45: #{tpu_custom_call.1} parent=5 // pred_check
        _
      $region46: #{tpu_custom_call.1} parent=5 // pred_check_branch
        %346 = sbr.rel (%p343) target = $region48
      $region47: #{tpu_custom_call.1} parent=5 // pred_region
        %s347 = ssub.s32 %s22, 1
        %s348 = sand.u32 %s47, 1
        %s349 = scalar_lea.sflag [#allocation3], %s348
        %s350 = sand.u32 %s47, 1
        %s351 = smul.addr %s350, 192
        %s352 = scalar_lea.vmem [#allocation2], %s351
        // Predicated region
        $region49: #{tpu_custom_call.1} parent=47 // pred_check
          %p353 = pneg %p60
        $region50: #{tpu_custom_call.1} parent=47 // pred_check_branch
          %355 = sbr.rel (%p353) target = $region52
        $region51: #{tpu_custom_call.1} parent=47 // pred_region
          %356 = dma.done %s349, 3072
        $region52: #{tpu_custom_call.1} parent=47 // pred_fallthru
          _
        %s357 = sand.u32 %s27, 1
        %s358 = scalar_lea.sflag [#allocation6], %s357
        %s359 = sand.u32 %s73, 1
        %s360 = smul.addr %s359, 192
        %s361 = scalar_lea.vmem [#allocation5], %s360
        // Predicated region
        $region53: #{tpu_custom_call.1} parent=47 // pred_check
          %p362 = pneg %p86
        $region54: #{tpu_custom_call.1} parent=47 // pred_check_branch
          %364 = sbr.rel (%p362) target = $region56
        $region55: #{tpu_custom_call.1} parent=47 // pred_region
          %365 = dma.done %s358, 3072
        $region56: #{tpu_custom_call.1} parent=47 // pred_fallthru
          _
        %s366 = sand.u32 %s27, 1
        %s367 = scalar_lea.sflag [#allocation6], %s366
        %s368 = sand.u32 %s99, 1
        %s369 = smul.addr %s368, 192
        %s370 = scalar_lea.vmem [#allocation7], %s369
        // Predicated region
        $region57: #{tpu_custom_call.1} parent=47 // pred_check
          %p371 = pneg %p112
        $region58: #{tpu_custom_call.1} parent=47 // pred_check_branch
          %373 = sbr.rel (%p371) target = $region60
        $region59: #{tpu_custom_call.1} parent=47 // pred_region
          %374 = dma.done %s367, 3072
        $region60: #{tpu_custom_call.1} parent=47 // pred_fallthru
          _
        %s375 = sand.u32 %s47, 1
        %s376 = scalar_lea.sflag [#allocation3], %s375
        %s377 = sand.u32 %s47, 1
        %s378 = smul.addr %s377, 192
        %s379 = scalar_lea.vmem [#allocation2], %s378
        %p380 = pneg %p60
        %p381 = pneg %p57
        %s382 = sand.u32 %s27, 1
        %s383 = scalar_lea.sflag [#allocation6], %s382
        %s384 = sand.u32 %s73, 1
        %s385 = smul.addr %s384, 192
        %s386 = scalar_lea.vmem [#allocation5], %s385
        %p387 = pneg %p86
        %p388 = pneg %p83
        %s389 = sand.u32 %s27, 1
        %s390 = scalar_lea.sflag [#allocation6], %s389
        %s391 = sand.u32 %s99, 1
        %s392 = smul.addr %s391, 192
        %s393 = scalar_lea.vmem [#allocation7], %s392
        %p394 = pneg %p112
        %p395 = pneg %p109
        %p396 = scmp.lt.s32.totalorder %s32, 1
        %s397 = scalar_select %p396, %s32, 1
        %s398 = scalar_lea.vmem %s3, %s397
        %p399 = pneg %p138
        %p400 = pneg %p135
        %p401 = scmp.lt.s32.totalorder %s32, 1
        %s402 = scalar_select %p401, %s32, 1
        %s403 = scalar_lea.vmem %s4, %s402
        %p404 = pneg %p164
        %p405 = pneg %p161
        %p406 = pneg %p185
        %p407 = pneg %p182
        %p408 = scmp.lt.s32.totalorder %s32, 1
        %s409 = scalar_select %p408, %s32, 1
        %s410 = scalar_lea.vmem %s6, %s409
        %p411 = pneg %p211
        %p412 = pneg %p208
        %p413 = pneg %p239
        %p414 = pneg %p236
        %s415 = sand.u32 %s226, 1
        %s416 = scalar_lea.sflag [#allocation4], %s415
        %s417 = sand.u32 %s226, 1
        %s418 = smul.addr %s417, 128
        %s419 = scalar_lea.vmem [#allocation8], %s418
        %s420 = smul.u32 16, %s31
        %p421 = scmp.lt.s32.totalorder %s32, 1
        %s422 = scalar_select %p421, %s32, 1
        %s423 = scalar_lea.vmem %s3, %s422
        %p424 = scmp.lt.s32.totalorder %s32, 1
        %s425 = scalar_select %p424, %s32, 1
        %s426 = scalar_lea.vmem %s4, %s425
        %p427 = scmp.lt.s32.totalorder %s32, 1
        %s428 = scalar_select %p427, %s32, 1
        %s429 = scalar_lea.vmem %s6, %s428
        %s430 = smul.u32 16, %s31
        %v432 = vld [vmem:[%s352] sm:$0xff]
        %v433 = vld [vmem:[%s352 + $0x8] sm:$0xf]
        %v434 = vld [vmem:[%s352 + $0xc] sm:$0xff]
        %v435 = vld [vmem:[%s352 + $0x14] sm:$0xf]
        %v436 = vld [vmem:[%s352 + $0x18] sm:$0xff]
        %v437 = vld [vmem:[%s352 + $0x20] sm:$0xf]
        %v438 = vld [vmem:[%s352 + $0x24] sm:$0xff]
        %v439 = vld [vmem:[%s352 + $0x2c] sm:$0xf]
        %v440 = vld [vmem:[%s352 + $0x30] sm:$0xff]
        %v441 = vld [vmem:[%s352 + $0x38] sm:$0xf]
        %v442 = vld [vmem:[%s352 + $0x3c] sm:$0xff]
        %v443 = vld [vmem:[%s352 + $0x44] sm:$0xf]
        %v444 = vld [vmem:[%s352 + $0x48] sm:$0xff]
        %v445 = vld [vmem:[%s352 + $0x50] sm:$0xf]
        %v446 = vld [vmem:[%s352 + $0x54] sm:$0xff]
        %v447 = vld [vmem:[%s352 + $0x5c] sm:$0xf]
        %v448 = vld [vmem:[%s352 + $0x60] sm:$0xff]
        %v449 = vld [vmem:[%s352 + $0x68] sm:$0xf]
        %v450 = vld [vmem:[%s352 + $0x6c] sm:$0xff]
        %v451 = vld [vmem:[%s352 + $0x74] sm:$0xf]
        %v452 = vld [vmem:[%s352 + $0x78] sm:$0xff]
        %v453 = vld [vmem:[%s352 + $0x80] sm:$0xf]
        %v454 = vld [vmem:[%s352 + $0x84] sm:$0xff]
        %v455 = vld [vmem:[%s352 + $0x8c] sm:$0xf]
        %v456 = vld [vmem:[%s352 + $0x90] sm:$0xff]
        %v457 = vld [vmem:[%s352 + $0x98] sm:$0xf]
        %v458 = vld [vmem:[%s352 + $0x9c] sm:$0xff]
        %v459 = vld [vmem:[%s352 + $0xa4] sm:$0xf]
        %v460 = vld [vmem:[%s352 + $0xa8] sm:$0xff]
        %v461 = vld [vmem:[%s352 + $0xb0] sm:$0xf]
        %v462 = vld [vmem:[%s352 + $0xb4] sm:$0xff]
        %v463 = vld [vmem:[%s352 + $0xbc] sm:$0xf]
        %v464 = vld [vmem:[%s361] sm:$0xf]
        %v465 = vld [vmem:[%s361 + $0x4] sm:$0xf]
        %v466 = vld [vmem:[%s361 + $0x8] sm:$0xf]
        %v467 = vld [vmem:[%s361 + $0xc] sm:$0xf]
        %v468 = vld [vmem:[%s361 + $0x10] sm:$0xf]
        %v469 = vld [vmem:[%s361 + $0x14] sm:$0xf]
        %v470 = vld [vmem:[%s361 + $0x18] sm:$0xf]
        %v471 = vld [vmem:[%s361 + $0x1c] sm:$0xf]
        %v472 = vld [vmem:[%s361 + $0x20] sm:$0xf]
        %v473 = vld [vmem:[%s361 + $0x24] sm:$0xf]
        %v474 = vld [vmem:[%s361 + $0x28] sm:$0xf]
        %v475 = vld [vmem:[%s361 + $0x2c] sm:$0xf]
        %v476 = vld [vmem:[%s361 + $0x30] sm:$0xf]
        %v477 = vld [vmem:[%s361 + $0x34] sm:$0xf]
        %v478 = vld [vmem:[%s361 + $0x38] sm:$0xf]
        %v479 = vld [vmem:[%s361 + $0x3c] sm:$0xf]
        %v480 = vld [vmem:[%s361 + $0x40] sm:$0xf]
        %v481 = vld [vmem:[%s361 + $0x44] sm:$0xf]
        %v482 = vld [vmem:[%s361 + $0x48] sm:$0xf]
        %v483 = vld [vmem:[%s361 + $0x4c] sm:$0xf]
        %v484 = vld [vmem:[%s361 + $0x50] sm:$0xf]
        %v485 = vld [vmem:[%s361 + $0x54] sm:$0xf]
        %v486 = vld [vmem:[%s361 + $0x58] sm:$0xf]
        %v487 = vld [vmem:[%s361 + $0x5c] sm:$0xf]
        %v488 = vld [vmem:[%s361 + $0x60] sm:$0xf]
        %v489 = vld [vmem:[%s361 + $0x64] sm:$0xf]
        %v490 = vld [vmem:[%s361 + $0x68] sm:$0xf]
        %v491 = vld [vmem:[%s361 + $0x6c] sm:$0xf]
        %v492 = vld [vmem:[%s361 + $0x70] sm:$0xf]
        %v493 = vld [vmem:[%s361 + $0x74] sm:$0xf]
        %v494 = vld [vmem:[%s361 + $0x78] sm:$0xf]
        %v495 = vld [vmem:[%s361 + $0x7c] sm:$0xf]
        %v496 = vld [vmem:[%s361 + $0x80] sm:$0xf]
        %v497 = vld [vmem:[%s361 + $0x84] sm:$0xf]
        %v498 = vld [vmem:[%s361 + $0x88] sm:$0xf]
        %v499 = vld [vmem:[%s361 + $0x8c] sm:$0xf]
        %v500 = vld [vmem:[%s361 + $0x90] sm:$0xf]
        %v501 = vld [vmem:[%s361 + $0x94] sm:$0xf]
        %v502 = vld [vmem:[%s361 + $0x98] sm:$0xf]
        %v503 = vld [vmem:[%s361 + $0x9c] sm:$0xf]
        %v504 = vld [vmem:[%s361 + $0xa0] sm:$0xf]
        %v505 = vld [vmem:[%s361 + $0xa4] sm:$0xf]
        %v506 = vld [vmem:[%s361 + $0xa8] sm:$0xf]
        %v507 = vld [vmem:[%s361 + $0xac] sm:$0xf]
        %v508 = vld [vmem:[%s361 + $0xb0] sm:$0xf]
        %v509 = vld [vmem:[%s361 + $0xb4] sm:$0xf]
        %v510 = vld [vmem:[%s361 + $0xb8] sm:$0xf]
        %v511 = vld [vmem:[%s361 + $0xbc] sm:$0xf]
        %v512 = vunpack.c.l.bf16 %v432
        %v513 = vunpack.c.h.bf16 %v432
        %v514 = vunpack.c.l.bf16 %v433
        %v515 = vunpack.c.l.bf16 %v434
        %v516 = vunpack.c.h.bf16 %v434
        %v517 = vunpack.c.l.bf16 %v435
        %v518 = vunpack.c.l.bf16 %v436
        %v519 = vunpack.c.h.bf16 %v436
        %v520 = vunpack.c.l.bf16 %v437
        %v521 = vunpack.c.l.bf16 %v438
        %v522 = vunpack.c.h.bf16 %v438
        %v523 = vunpack.c.l.bf16 %v439
        %v524 = vunpack.c.l.bf16 %v440
        %v525 = vunpack.c.h.bf16 %v440
        %v526 = vunpack.c.l.bf16 %v441
        %v527 = vunpack.c.l.bf16 %v442
        %v528 = vunpack.c.h.bf16 %v442
        %v529 = vunpack.c.l.bf16 %v443
        %v530 = vunpack.c.l.bf16 %v444
        %v531 = vunpack.c.h.bf16 %v444
        %v532 = vunpack.c.l.bf16 %v445
        %v533 = vunpack.c.l.bf16 %v446
        %v534 = vunpack.c.h.bf16 %v446
        %v535 = vunpack.c.l.bf16 %v447
        %v536 = vunpack.c.l.bf16 %v448
        %v537 = vunpack.c.h.bf16 %v448
        %v538 = vunpack.c.l.bf16 %v449
        %v539 = vunpack.c.l.bf16 %v450
        %v540 = vunpack.c.h.bf16 %v450
        %v541 = vunpack.c.l.bf16 %v451
        %v542 = vunpack.c.l.bf16 %v452
        %v543 = vunpack.c.h.bf16 %v452
        %v544 = vunpack.c.l.bf16 %v453
        %v545 = vunpack.c.l.bf16 %v454
        %v546 = vunpack.c.h.bf16 %v454
        %v547 = vunpack.c.l.bf16 %v455
        %v548 = vunpack.c.l.bf16 %v456
        %v549 = vunpack.c.h.bf16 %v456
        %v550 = vunpack.c.l.bf16 %v457
        %v551 = vunpack.c.l.bf16 %v458
        %v552 = vunpack.c.h.bf16 %v458
        %v553 = vunpack.c.l.bf16 %v459
        %v554 = vunpack.c.l.bf16 %v460
        %v555 = vunpack.c.h.bf16 %v460
        %v556 = vunpack.c.l.bf16 %v461
        %v557 = vunpack.c.l.bf16 %v462
        %v558 = vunpack.c.h.bf16 %v462
        %v559 = vunpack.c.l.bf16 %v463
        %v560 = vld [vmem:[%s5] sm:$0x7]
        %v562 = vlaneseq
        %v563 = vshrl.u32 %v562, 7
        %v564 = vsub.s32 0, %v563
        %v565 = vrot.slane %v560, %v564
        %v566 = vlaneseq
        %v567 = vshrl.u32 %v566, 7
        %v568 = vsub.s32 1, %v567
        %v569 = vrot.slane %v560, %v568
        %v570 = vlaneseq
        %v571 = vshrl.u32 %v570, 7
        %v572 = vsub.s32 2, %v571
        %v573 = vrot.slane %v560, %v572
        %v577 = vmul.f32 %v512, %v565
        %v578 = vmul.f32 %v513, %v569
        %v579 = vmul.f32 %v514, %v573
        %v580 = vmul.f32 %v515, %v565
        %v581 = vmul.f32 %v516, %v569
        %v582 = vmul.f32 %v517, %v573
        %v583 = vmul.f32 %v518, %v565
        %v584 = vmul.f32 %v519, %v569
        %v585 = vmul.f32 %v520, %v573
        %v586 = vmul.f32 %v521, %v565
        %v587 = vmul.f32 %v522, %v569
        %v588 = vmul.f32 %v523, %v573
        %v589 = vmul.f32 %v524, %v565
        %v590 = vmul.f32 %v525, %v569
        %v591 = vmul.f32 %v526, %v573
        %v592 = vmul.f32 %v527, %v565
        %v593 = vmul.f32 %v528, %v569
        %v594 = vmul.f32 %v529, %v573
        %v595 = vmul.f32 %v530, %v565
        %v596 = vmul.f32 %v531, %v569
        %v597 = vmul.f32 %v532, %v573
        %v598 = vmul.f32 %v533, %v565
        %v599 = vmul.f32 %v534, %v569
        %v600 = vmul.f32 %v535, %v573
        %v601 = vmul.f32 %v536, %v565
        %v602 = vmul.f32 %v537, %v569
        %v603 = vmul.f32 %v538, %v573
        %v604 = vmul.f32 %v539, %v565
        %v605 = vmul.f32 %v540, %v569
        %v606 = vmul.f32 %v541, %v573
        %v607 = vmul.f32 %v542, %v565
        %v608 = vmul.f32 %v543, %v569
        %v609 = vmul.f32 %v544, %v573
        %v610 = vmul.f32 %v545, %v565
        %v611 = vmul.f32 %v546, %v569
        %v612 = vmul.f32 %v547, %v573
        %v613 = vmul.f32 %v548, %v565
        %v614 = vmul.f32 %v549, %v569
        %v615 = vmul.f32 %v550, %v573
        %v616 = vmul.f32 %v551, %v565
        %v617 = vmul.f32 %v552, %v569
        %v618 = vmul.f32 %v553, %v573
        %v619 = vmul.f32 %v554, %v565
        %v620 = vmul.f32 %v555, %v569
        %v621 = vmul.f32 %v556, %v573
        %v622 = vmul.f32 %v557, %v565
        %v623 = vmul.f32 %v558, %v569
        %v624 = vmul.f32 %v559, %v573
        %v625 = vpack.c.bf16 %v580, %v577
        %v626 = vpack.c.bf16 %v581, %v578
        %v627 = vpack.c.bf16 %v582, %v579
        %v628 = vpack.c.bf16 %v586, %v583
        %v629 = vpack.c.bf16 %v587, %v584
        %v630 = vpack.c.bf16 %v588, %v585
        %v631 = vpack.c.bf16 %v592, %v589
        %v632 = vpack.c.bf16 %v593, %v590
        %v633 = vpack.c.bf16 %v594, %v591
        %v634 = vpack.c.bf16 %v598, %v595
        %v635 = vpack.c.bf16 %v599, %v596
        %v636 = vpack.c.bf16 %v600, %v597
        %v637 = vpack.c.bf16 %v604, %v601
        %v638 = vpack.c.bf16 %v605, %v602
        %v639 = vpack.c.bf16 %v606, %v603
        %v640 = vpack.c.bf16 %v610, %v607
        %v641 = vpack.c.bf16 %v611, %v608
        %v642 = vpack.c.bf16 %v612, %v609
        %v643 = vpack.c.bf16 %v616, %v613
        %v644 = vpack.c.bf16 %v617, %v614
        %v645 = vpack.c.bf16 %v618, %v615
        %v646 = vpack.c.bf16 %v622, %v619
        %v647 = vpack.c.bf16 %v623, %v620
        %v648 = vpack.c.bf16 %v624, %v621
        %v649 = vld [vmem:[%s370] sm:$0xf]
        %v650 = vld [vmem:[%s370 + $0x4] sm:$0xf]
        %v651 = vld [vmem:[%s370 + $0x8] sm:$0xf]
        %v652 = vld [vmem:[%s370 + $0xc] sm:$0xf]
        %v653 = vld [vmem:[%s370 + $0x10] sm:$0xf]
        %v654 = vld [vmem:[%s370 + $0x14] sm:$0xf]
        %v655 = vld [vmem:[%s370 + $0x18] sm:$0xf]
        %v656 = vld [vmem:[%s370 + $0x1c] sm:$0xf]
        %v657 = vld [vmem:[%s370 + $0x20] sm:$0xf]
        %v658 = vld [vmem:[%s370 + $0x24] sm:$0xf]
        %v659 = vld [vmem:[%s370 + $0x28] sm:$0xf]
        %v660 = vld [vmem:[%s370 + $0x2c] sm:$0xf]
        %v661 = vld [vmem:[%s370 + $0x30] sm:$0xf]
        %v662 = vld [vmem:[%s370 + $0x34] sm:$0xf]
        %v663 = vld [vmem:[%s370 + $0x38] sm:$0xf]
        %v664 = vld [vmem:[%s370 + $0x3c] sm:$0xf]
        %v665 = vld [vmem:[%s370 + $0x40] sm:$0xf]
        %v666 = vld [vmem:[%s370 + $0x44] sm:$0xf]
        %v667 = vld [vmem:[%s370 + $0x48] sm:$0xf]
        %v668 = vld [vmem:[%s370 + $0x4c] sm:$0xf]
        %v669 = vld [vmem:[%s370 + $0x50] sm:$0xf]
        %v670 = vld [vmem:[%s370 + $0x54] sm:$0xf]
        %v671 = vld [vmem:[%s370 + $0x58] sm:$0xf]
        %v672 = vld [vmem:[%s370 + $0x5c] sm:$0xf]
        %v673 = vld [vmem:[%s370 + $0x60] sm:$0xf]
        %v674 = vld [vmem:[%s370 + $0x64] sm:$0xf]
        %v675 = vld [vmem:[%s370 + $0x68] sm:$0xf]
        %v676 = vld [vmem:[%s370 + $0x6c] sm:$0xf]
        %v677 = vld [vmem:[%s370 + $0x70] sm:$0xf]
        %v678 = vld [vmem:[%s370 + $0x74] sm:$0xf]
        %v679 = vld [vmem:[%s370 + $0x78] sm:$0xf]
        %v680 = vld [vmem:[%s370 + $0x7c] sm:$0xf]
        %v681 = vld [vmem:[%s370 + $0x80] sm:$0xf]
        %v682 = vld [vmem:[%s370 + $0x84] sm:$0xf]
        %v683 = vld [vmem:[%s370 + $0x88] sm:$0xf]
        %v684 = vld [vmem:[%s370 + $0x8c] sm:$0xf]
        %v685 = vld [vmem:[%s370 + $0x90] sm:$0xf]
        %v686 = vld [vmem:[%s370 + $0x94] sm:$0xf]
        %v687 = vld [vmem:[%s370 + $0x98] sm:$0xf]
        %v688 = vld [vmem:[%s370 + $0x9c] sm:$0xf]
        %v689 = vld [vmem:[%s370 + $0xa0] sm:$0xf]
        %v690 = vld [vmem:[%s370 + $0xa4] sm:$0xf]
        %v691 = vld [vmem:[%s370 + $0xa8] sm:$0xf]
        %v692 = vld [vmem:[%s370 + $0xac] sm:$0xf]
        %v693 = vld [vmem:[%s370 + $0xb0] sm:$0xf]
        %v694 = vld [vmem:[%s370 + $0xb4] sm:$0xf]
        %v695 = vld [vmem:[%s370 + $0xb8] sm:$0xf]
        %v696 = vld [vmem:[%s370 + $0xbc] sm:$0xf]
        %v697 = vld [vmem:[%s423] sm:$0x1]
        %v699 = vlaneseq
        %v700 = vshrl.u32 %v699, 7
        %v701 = vsub.s32 0, %v700
        %v702 = vrot.slane %v697, %v701
        %v736 = vunpack.c.l.b16 %v432
        %v737 = vunpack.c.h.b16 %v432
        %v738 = vunpack.c.l.b16 %v433
        %v739 = vunpack.c.l.b16 %v434
        %v740 = vunpack.c.h.b16 %v434
        %v741 = vunpack.c.l.b16 %v435
        %v742 = vunpack.c.l.b16 %v436
        %v743 = vunpack.c.h.b16 %v436
        %v744 = vunpack.c.l.b16 %v437
        %v745 = vunpack.c.l.b16 %v438
        %v746 = vunpack.c.h.b16 %v438
        %v747 = vunpack.c.l.b16 %v439
        %v748 = vunpack.c.l.b16 %v440
        %v749 = vunpack.c.h.b16 %v440
        %v750 = vunpack.c.l.b16 %v441
        %v751 = vunpack.c.l.b16 %v442
        %v752 = vunpack.c.h.b16 %v442
        %v753 = vunpack.c.l.b16 %v443
        %v754 = vunpack.c.l.b16 %v444
        %v755 = vunpack.c.h.b16 %v444
        %v756 = vunpack.c.l.b16 %v445
        %v757 = vunpack.c.l.b16 %v446
        %v758 = vunpack.c.h.b16 %v446
        %v759 = vunpack.c.l.b16 %v447
        %v760 = vunpack.c.l.b16 %v448
        %v761 = vunpack.c.h.b16 %v448
        %v762 = vunpack.c.l.b16 %v449
        %v763 = vunpack.c.l.b16 %v450
        %v764 = vunpack.c.h.b16 %v450
        %v765 = vunpack.c.l.b16 %v451
        %v766 = vunpack.c.l.b16 %v452
        %v767 = vunpack.c.h.b16 %v452
        %v768 = vunpack.c.l.b16 %v453
        %v769 = vunpack.c.l.b16 %v454
        %v770 = vunpack.c.h.b16 %v454
        %v771 = vunpack.c.l.b16 %v455
        %v772 = vunpack.c.l.b16 %v456
        %v773 = vunpack.c.h.b16 %v456
        %v774 = vunpack.c.l.b16 %v457
        %v775 = vunpack.c.l.b16 %v458
        %v776 = vunpack.c.h.b16 %v458
        %v777 = vunpack.c.l.b16 %v459
        %v778 = vunpack.c.l.b16 %v460
        %v779 = vunpack.c.h.b16 %v460
        %v780 = vunpack.c.l.b16 %v461
        %v781 = vunpack.c.l.b16 %v462
        %v782 = vunpack.c.h.b16 %v462
        %v783 = vunpack.c.l.b16 %v463
        %v784 = vpack.c.b16 %v739, %v736
        %v785 = vpack.c.b16 %v740, %v737
        %v786 = vpack.c.b16 %v741, %v738
        %v787 = vpack.c.b16 %v745, %v742
        %v788 = vpack.c.b16 %v746, %v743
        %v789 = vpack.c.b16 %v747, %v744
        %v790 = vpack.c.b16 %v751, %v748
        %v791 = vpack.c.b16 %v752, %v749
        %v792 = vpack.c.b16 %v753, %v750
        %v793 = vpack.c.b16 %v757, %v754
        %v794 = vpack.c.b16 %v758, %v755
        %v795 = vpack.c.b16 %v759, %v756
        %v796 = vpack.c.b16 %v763, %v760
        %v797 = vpack.c.b16 %v764, %v761
        %v798 = vpack.c.b16 %v765, %v762
        %v799 = vpack.c.b16 %v769, %v766
        %v800 = vpack.c.b16 %v770, %v767
        %v801 = vpack.c.b16 %v771, %v768
        %v802 = vpack.c.b16 %v775, %v772
        %v803 = vpack.c.b16 %v776, %v773
        %v804 = vpack.c.b16 %v777, %v774
        %v805 = vpack.c.b16 %v781, %v778
        %v806 = vpack.c.b16 %v782, %v779
        %v807 = vpack.c.b16 %v783, %v780
        %v880 = vunpack.c.l.b16 %v464
        %v881 = vunpack.c.l.b16 %v465
        %v882 = vunpack.c.l.b16 %v466
        %v883 = vunpack.c.l.b16 %v467
        %v884 = vunpack.c.l.b16 %v468
        %v885 = vunpack.c.l.b16 %v469
        %v886 = vunpack.c.l.b16 %v470
        %v887 = vunpack.c.l.b16 %v471
        %v888 = vunpack.c.l.b16 %v472
        %v889 = vunpack.c.l.b16 %v473
        %v890 = vunpack.c.l.b16 %v474
        %v891 = vunpack.c.l.b16 %v475
        %v892 = vunpack.c.l.b16 %v476
        %v893 = vunpack.c.l.b16 %v477
        %v894 = vunpack.c.l.b16 %v478
        %v895 = vunpack.c.l.b16 %v479
        %v896 = vunpack.c.l.b16 %v480
        %v897 = vunpack.c.l.b16 %v481
        %v898 = vunpack.c.l.b16 %v482
        %v899 = vunpack.c.l.b16 %v483
        %v900 = vunpack.c.l.b16 %v484
        %v901 = vunpack.c.l.b16 %v485
        %v902 = vunpack.c.l.b16 %v486
        %v903 = vunpack.c.l.b16 %v487
        %v904 = vunpack.c.l.b16 %v488
        %v905 = vunpack.c.l.b16 %v489
        %v906 = vunpack.c.l.b16 %v490
        %v907 = vunpack.c.l.b16 %v491
        %v908 = vunpack.c.l.b16 %v492
        %v909 = vunpack.c.l.b16 %v493
        %v910 = vunpack.c.l.b16 %v494
        %v911 = vunpack.c.l.b16 %v495
        %v912 = vunpack.c.l.b16 %v496
        %v913 = vunpack.c.l.b16 %v497
        %v914 = vunpack.c.l.b16 %v498
        %v915 = vunpack.c.l.b16 %v499
        %v916 = vunpack.c.l.b16 %v500
        %v917 = vunpack.c.l.b16 %v501
        %v918 = vunpack.c.l.b16 %v502
        %v919 = vunpack.c.l.b16 %v503
        %v920 = vunpack.c.l.b16 %v504
        %v921 = vunpack.c.l.b16 %v505
        %v922 = vunpack.c.l.b16 %v506
        %v923 = vunpack.c.l.b16 %v507
        %v924 = vunpack.c.l.b16 %v508
        %v925 = vunpack.c.l.b16 %v509
        %v926 = vunpack.c.l.b16 %v510
        %v927 = vunpack.c.l.b16 %v511
        %v928 = vpack.c.b16 %v881, %v880
        %v929 = vpack.c.b16 %v883, %v882
        %v930 = vpack.c.b16 %v885, %v884
        %v931 = vpack.c.b16 %v887, %v886
        %v932 = vpack.c.b16 %v889, %v888
        %v933 = vpack.c.b16 %v891, %v890
        %v934 = vpack.c.b16 %v893, %v892
        %v935 = vpack.c.b16 %v895, %v894
        %v936 = vpack.c.b16 %v897, %v896
        %v937 = vpack.c.b16 %v899, %v898
        %v938 = vpack.c.b16 %v901, %v900
        %v939 = vpack.c.b16 %v903, %v902
        %v940 = vpack.c.b16 %v905, %v904
        %v941 = vpack.c.b16 %v907, %v906
        %v942 = vpack.c.b16 %v909, %v908
        %v943 = vpack.c.b16 %v911, %v910
        %v944 = vpack.c.b16 %v913, %v912
        %v945 = vpack.c.b16 %v915, %v914
        %v946 = vpack.c.b16 %v917, %v916
        %v947 = vpack.c.b16 %v919, %v918
        %v948 = vpack.c.b16 %v921, %v920
        %v949 = vpack.c.b16 %v923, %v922
        %v950 = vpack.c.b16 %v925, %v924
        %v951 = vpack.c.b16 %v927, %v926
        %976 = vmatprep.subr.bf16.mxu0 0
        %977 = vmatpush1.bf16.msra.mxu0 %v928
        %978 = vmatprep.subr.bf16.mxu0 0
        %979 = vmatpush1.bf16.msra.mxu0 %v929
        %980 = vmatprep.subr.bf16.mxu0 0
        %981 = vmatpush1.bf16.msra.mxu0 %v930
        %982 = vmatprep.subr.bf16.mxu0 0
        %983 = vmatpush1.bf16.msra.mxu0 %v931
        %984 = vmatprep.subr.bf16.mxu0 0
        %985 = vmatpush1.bf16.msra.mxu0 %v932
        %986 = vmatprep.subr.bf16.mxu0 0
        %987 = vmatpush1.bf16.msra.mxu0 %v933
        %988 = vmatprep.subr.bf16.mxu0 0
        %989 = vmatpush1.bf16.msra.mxu0 %v934
        %990 = vmatprep.subr.bf16.mxu0 0
        %991 = vmatpush1.bf16.msra.mxu0 %v935
        %992 = vmatprep.subr.bf16.mxu0 0
        %993 = vmatpush1.bf16.msra.mxu0 %v936
        %994 = vmatprep.subr.bf16.mxu0 0
        %995 = vmatpush1.bf16.msra.mxu0 %v937
        %996 = vmatprep.subr.bf16.mxu0 0
        %997 = vmatpush1.bf16.msra.mxu0 %v938
        %998 = vmatprep.subr.bf16.mxu0 0
        %999 = vmatpush1.bf16.msra.mxu0 %v939
        %1000 = vmatprep.subr.bf16.mxu0 0
        %1001 = vmatpush1.bf16.msra.mxu0 %v940
        %1002 = vmatprep.subr.bf16.mxu0 0
        %1003 = vmatpush1.bf16.msra.mxu0 %v941
        %1004 = vmatprep.subr.bf16.mxu0 0
        %1005 = vmatpush1.bf16.msra.mxu0 %v942
        %1006 = vmatprep.subr.bf16.mxu0 0
        %1007 = vmatpush1.bf16.msra.mxu0 %v943
        %1008 = vmatprep.mubr.bf16.mxu0 %v785
        %1009 = vmatmul.mubr.bf16.gmra.mrb[0].mxu0 %v784
        %v1010 = vpop.f32.mrb[0].mxu0
        %v1011 = vadd.f32 %v702, %v1010
        %v1012 = vpop.f32.mrb[0].mxu0
        %v1013 = vpop.f32.mrb[0].mxu0
        %v1014 = vadd.f32 %v702, %v1013
        %v1015 = vpop.f32.mrb[0].mxu0
        %1016 = vmatprep.mubr.bf16.mxu0 %v788
        %1017 = vmatmul.mubr.bf16.gmra.mrb[0].mxu0 %v787
        %v1018 = vpop.f32.mrb[0].mxu0
        %v1019 = vadd.f32 %v702, %v1018
        %v1020 = vpop.f32.mrb[0].mxu0
        %v1021 = vpop.f32.mrb[0].mxu0
        %v1022 = vadd.f32 %v702, %v1021
        %v1023 = vpop.f32.mrb[0].mxu0
        %1024 = vmatprep.mubr.bf16.mxu0 %v791
        %1025 = vmatmul.mubr.bf16.gmra.mrb[0].mxu0 %v790
        %v1026 = vpop.f32.mrb[0].mxu0
        %v1027 = vadd.f32 %v702, %v1026
        %v1028 = vpop.f32.mrb[0].mxu0
        %v1029 = vpop.f32.mrb[0].mxu0
        %v1030 = vadd.f32 %v702, %v1029
        %v1031 = vpop.f32.mrb[0].mxu0
        %1032 = vmatprep.mubr.bf16.mxu0 %v794
        %1033 = vmatmul.mubr.bf16.gmra.mrb[0].mxu0 %v793
        %v1034 = vpop.f32.mrb[0].mxu0
        %v1035 = vadd.f32 %v702, %v1034
        %v1036 = vpop.f32.mrb[0].mxu0
        %v1037 = vpop.f32.mrb[0].mxu0
        %v1038 = vadd.f32 %v702, %v1037
        %v1039 = vpop.f32.mrb[0].mxu0
        %1040 = vmatprep.mubr.bf16.mxu0 %v797
        %1041 = vmatmul.mubr.bf16.gmra.mrb[0].mxu0 %v796
        %v1042 = vpop.f32.mrb[0].mxu0
        %v1043 = vadd.f32 %v702, %v1042
        %v1044 = vpop.f32.mrb[0].mxu0
        %v1045 = vpop.f32.mrb[0].mxu0
        %v1046 = vadd.f32 %v702, %v1045
        %v1047 = vpop.f32.mrb[0].mxu0
        %1048 = vmatprep.mubr.bf16.mxu0 %v800
        %1049 = vmatmul.mubr.bf16.gmra.mrb[0].mxu0 %v799
        %v1050 = vpop.f32.mrb[0].mxu0
        %v1051 = vadd.f32 %v702, %v1050
        %v1052 = vpop.f32.mrb[0].mxu0
        %v1053 = vpop.f32.mrb[0].mxu0
        %v1054 = vadd.f32 %v702, %v1053
        %v1055 = vpop.f32.mrb[0].mxu0
        %1056 = vmatprep.mubr.bf16.mxu0 %v803
        %1057 = vmatmul.mubr.bf16.gmra.mrb[0].mxu0 %v802
        %v1058 = vpop.f32.mrb[0].mxu0
        %v1059 = vadd.f32 %v702, %v1058
        %v1060 = vpop.f32.mrb[0].mxu0
        %v1061 = vpop.f32.mrb[0].mxu0
        %v1062 = vadd.f32 %v702, %v1061
        %v1063 = vpop.f32.mrb[0].mxu0
        %1064 = vmatprep.mubr.bf16.mxu0 %v806
        %1065 = vmatmul.mubr.bf16.gmra.mrb[0].mxu0 %v805
        %v1066 = vpop.f32.mrb[0].mxu0
        %v1067 = vadd.f32 %v702, %v1066
        %v1068 = vpop.f32.mrb[0].mxu0
        %v1069 = vpop.f32.mrb[0].mxu0
        %v1070 = vadd.f32 %v702, %v1069
        %v1071 = vpop.f32.mrb[0].mxu0
        %1072 = vdwg.mxu0
        %1073 = vmatprep.subr.bf16.mxu0 0
        %1074 = vmatpush1.bf16.msra.mxu0 %v944
        %1075 = vmatprep.subr.bf16.mxu0 0
        %1076 = vmatpush1.bf16.msra.mxu0 %v945
        %1077 = vmatprep.subr.bf16.mxu0 0
        %1078 = vmatpush1.bf16.msra.mxu0 %v946
        %1079 = vmatprep.subr.bf16.mxu0 0
        %1080 = vmatpush1.bf16.msra.mxu0 %v947
        %1081 = vmatprep.subr.bf16.mxu0 0
        %1082 = vmatpush1.bf16.msra.mxu0 %v948
        %1083 = vmatprep.subr.bf16.mxu0 0
        %1084 = vmatpush1.bf16.msra.mxu0 %v949
        %1085 = vmatprep.subr.bf16.mxu0 0
        %1086 = vmatpush1.bf16.msra.mxu0 %v950
        %1087 = vmatprep.subr.bf16.mxu0 0
        %1088 = vmatpush1.bf16.msra.mxu0 %v951
        %1089 = vmatprep.subr.bf16.mxu0 0
        %1090 = vmatpush1.bf16.msra.mxu0 0
        %1091 = vmatprep.subr.bf16.mxu0 0
        %1092 = vmatpush1.bf16.msra.mxu0 0
        %1093 = vmatprep.subr.bf16.mxu0 0
        %1094 = vmatpush1.bf16.msra.mxu0 0
        %1095 = vmatprep.subr.bf16.mxu0 0
        %1096 = vmatpush1.bf16.msra.mxu0 0
        %1097 = vmatprep.subr.bf16.mxu0 0
        %1098 = vmatpush1.bf16.msra.mxu0 0
        %1099 = vmatprep.subr.bf16.mxu0 0
        %1100 = vmatpush1.bf16.msra.mxu0 0
        %1101 = vmatprep.subr.bf16.mxu0 0
        %1102 = vmatpush1.bf16.msra.mxu0 0
        %1103 = vmatprep.subr.bf16.mxu0 0
        %1104 = vmatpush1.bf16.msra.mxu0 0
        %1105 = vmatprep.mubr.bf16.mxu0 0
        %1106 = vmatmul.mubr.bf16.gmra.mrb[0].mxu0 %v786
        %v1107 = vpop.f32.mrb[0].mxu0
        %v1108 = vadd.f32 %v1011, %v1107
        %v1109 = vpop.f32.mrb[0].mxu0
        %v1110 = vpop.f32.mrb[0].mxu0
        %v1111 = vadd.f32 %v1014, %v1110
        %v1112 = vpop.f32.mrb[0].mxu0
        %1113 = vmatprep.mubr.bf16.mxu0 0
        %1114 = vmatmul.mubr.bf16.gmra.mrb[0].mxu0 %v789
        %v1115 = vpop.f32.mrb[0].mxu0
        %v1116 = vadd.f32 %v1019, %v1115
        %v1117 = vpop.f32.mrb[0].mxu0
        %v1118 = vpop.f32.mrb[0].mxu0
        %v1119 = vadd.f32 %v1022, %v1118
        %v1120 = vpop.f32.mrb[0].mxu0
        %1121 = vmatprep.mubr.bf16.mxu0 0
        %1122 = vmatmul.mubr.bf16.gmra.mrb[0].mxu0 %v792
        %v1123 = vpop.f32.mrb[0].mxu0
        %v1124 = vadd.f32 %v1027, %v1123
        %v1125 = vpop.f32.mrb[0].mxu0
        %v1126 = vpop.f32.mrb[0].mxu0
        %v1127 = vadd.f32 %v1030, %v1126
        %v1128 = vpop.f32.mrb[0].mxu0
        %1129 = vmatprep.mubr.bf16.mxu0 0
        %1130 = vmatmul.mubr.bf16.gmra.mrb[0].mxu0 %v795
        %v1131 = vpop.f32.mrb[0].mxu0
        %v1132 = vadd.f32 %v1035, %v1131
        %v1133 = vpop.f32.mrb[0].mxu0
        %v1134 = vpop.f32.mrb[0].mxu0
        %v1135 = vadd.f32 %v1038, %v1134
        %v1136 = vpop.f32.mrb[0].mxu0
        %1137 = vmatprep.mubr.bf16.mxu0 0
        %1138 = vmatmul.mubr.bf16.gmra.mrb[0].mxu0 %v798
        %v1139 = vpop.f32.mrb[0].mxu0
        %v1140 = vadd.f32 %v1043, %v1139
        %v1141 = vpop.f32.mrb[0].mxu0
        %v1142 = vpop.f32.mrb[0].mxu0
        %v1143 = vadd.f32 %v1046, %v1142
        %v1144 = vpop.f32.mrb[0].mxu0
        %1145 = vmatprep.mubr.bf16.mxu0 0
        %1146 = vmatmul.mubr.bf16.gmra.mrb[0].mxu0 %v801
        %v1147 = vpop.f32.mrb[0].mxu0
        %v1148 = vadd.f32 %v1051, %v1147
        %v1149 = vpop.f32.mrb[0].mxu0
        %v1150 = vpop.f32.mrb[0].mxu0
        %v1151 = vadd.f32 %v1054, %v1150
        %v1152 = vpop.f32.mrb[0].mxu0
        %1153 = vmatprep.mubr.bf16.mxu0 0
        %1154 = vmatmul.mubr.bf16.gmra.mrb[0].mxu0 %v804
        %v1155 = vpop.f32.mrb[0].mxu0
        %v1156 = vadd.f32 %v1059, %v1155
        %v1157 = vpop.f32.mrb[0].mxu0
        %v1158 = vpop.f32.mrb[0].mxu0
        %v1159 = vadd.f32 %v1062, %v1158
        %v1160 = vpop.f32.mrb[0].mxu0
        %1161 = vmatprep.mubr.bf16.mxu0 0
        %1162 = vmatmul.mubr.bf16.gmra.mrb[0].mxu0 %v807
        %v1163 = vpop.f32.mrb[0].mxu0
        %v1164 = vadd.f32 %v1067, %v1163
        %v1165 = vpop.f32.mrb[0].mxu0
        %v1166 = vpop.f32.mrb[0].mxu0
        %v1167 = vadd.f32 %v1070, %v1166
        %v1168 = vpop.f32.mrb[0].mxu0
        %1169 = vdwg.mxu0
        %v1170 = vld [vmem:[%s426] sm:$0x1]
        %v1172 = vlaneseq
        %v1173 = vshrl.u32 %v1172, 7
        %v1174 = vsub.s32 0, %v1173
        %v1175 = vrot.slane %v1170, %v1174
        %v1225 = vunpack.c.l.b16 %v649
        %v1226 = vunpack.c.l.b16 %v650
        %v1227 = vunpack.c.l.b16 %v651
        %v1228 = vunpack.c.l.b16 %v652
        %v1229 = vunpack.c.l.b16 %v653
        %v1230 = vunpack.c.l.b16 %v654
        %v1231 = vunpack.c.l.b16 %v655
        %v1232 = vunpack.c.l.b16 %v656
        %v1233 = vunpack.c.l.b16 %v657
        %v1234 = vunpack.c.l.b16 %v658
        %v1235 = vunpack.c.l.b16 %v659
        %v1236 = vunpack.c.l.b16 %v660
        %v1237 = vunpack.c.l.b16 %v661
        %v1238 = vunpack.c.l.b16 %v662
        %v1239 = vunpack.c.l.b16 %v663
        %v1240 = vunpack.c.l.b16 %v664
        %v1241 = vunpack.c.l.b16 %v665
        %v1242 = vunpack.c.l.b16 %v666
        %v1243 = vunpack.c.l.b16 %v667
        %v1244 = vunpack.c.l.b16 %v668
        %v1245 = vunpack.c.l.b16 %v669
        %v1246 = vunpack.c.l.b16 %v670
        %v1247 = vunpack.c.l.b16 %v671
        %v1248 = vunpack.c.l.b16 %v672
        %v1249 = vunpack.c.l.b16 %v673
        %v1250 = vunpack.c.l.b16 %v674
        %v1251 = vunpack.c.l.b16 %v675
        %v1252 = vunpack.c.l.b16 %v676
        %v1253 = vunpack.c.l.b16 %v677
        %v1254 = vunpack.c.l.b16 %v678
        %v1255 = vunpack.c.l.b16 %v679
        %v1256 = vunpack.c.l.b16 %v680
        %v1257 = vunpack.c.l.b16 %v681
        %v1258 = vunpack.c.l.b16 %v682
        %v1259 = vunpack.c.l.b16 %v683
        %v1260 = vunpack.c.l.b16 %v684
        %v1261 = vunpack.c.l.b16 %v685
        %v1262 = vunpack.c.l.b16 %v686
        %v1263 = vunpack.c.l.b16 %v687
        %v1264 = vunpack.c.l.b16 %v688
        %v1265 = vunpack.c.l.b16 %v689
        %v1266 = vunpack.c.l.b16 %v690
        %v1267 = vunpack.c.l.b16 %v691
        %v1268 = vunpack.c.l.b16 %v692
        %v1269 = vunpack.c.l.b16 %v693
        %v1270 = vunpack.c.l.b16 %v694
        %v1271 = vunpack.c.l.b16 %v695
        %v1272 = vunpack.c.l.b16 %v696
        %v1273 = vpack.c.b16 %v1226, %v1225
        %v1274 = vpack.c.b16 %v1228, %v1227
        %v1275 = vpack.c.b16 %v1230, %v1229
        %v1276 = vpack.c.b16 %v1232, %v1231
        %v1277 = vpack.c.b16 %v1234, %v1233
        %v1278 = vpack.c.b16 %v1236, %v1235
        %v1279 = vpack.c.b16 %v1238, %v1237
        %v1280 = vpack.c.b16 %v1240, %v1239
        %v1281 = vpack.c.b16 %v1242, %v1241
        %v1282 = vpack.c.b16 %v1244, %v1243
        %v1283 = vpack.c.b16 %v1246, %v1245
        %v1284 = vpack.c.b16 %v1248, %v1247
        %v1285 = vpack.c.b16 %v1250, %v1249
        %v1286 = vpack.c.b16 %v1252, %v1251
        %v1287 = vpack.c.b16 %v1254, %v1253
        %v1288 = vpack.c.b16 %v1256, %v1255
        %v1289 = vpack.c.b16 %v1258, %v1257
        %v1290 = vpack.c.b16 %v1260, %v1259
        %v1291 = vpack.c.b16 %v1262, %v1261
        %v1292 = vpack.c.b16 %v1264, %v1263
        %v1293 = vpack.c.b16 %v1266, %v1265
        %v1294 = vpack.c.b16 %v1268, %v1267
        %v1295 = vpack.c.b16 %v1270, %v1269
        %v1296 = vpack.c.b16 %v1272, %v1271
        %1321 = vmatprep.subr.bf16.mxu0 0
        %1322 = vmatpush1.bf16.msra.mxu0 %v1273
        %1323 = vmatprep.subr.bf16.mxu0 0
        %1324 = vmatpush1.bf16.msra.mxu0 %v1274
        %1325 = vmatprep.subr.bf16.mxu0 0
        %1326 = vmatpush1.bf16.msra.mxu0 %v1275
        %1327 = vmatprep.subr.bf16.mxu0 0
        %1328 = vmatpush1.bf16.msra.mxu0 %v1276
        %1329 = vmatprep.subr.bf16.mxu0 0
        %1330 = vmatpush1.bf16.msra.mxu0 %v1277
        %1331 = vmatprep.subr.bf16.mxu0 0
        %1332 = vmatpush1.bf16.msra.mxu0 %v1278
        %1333 = vmatprep.subr.bf16.mxu0 0
        %1334 = vmatpush1.bf16.msra.mxu0 %v1279
        %1335 = vmatprep.subr.bf16.mxu0 0
        %1336 = vmatpush1.bf16.msra.mxu0 %v1280
        %1337 = vmatprep.subr.bf16.mxu0 0
        %1338 = vmatpush1.bf16.msra.mxu0 %v1281
        %1339 = vmatprep.subr.bf16.mxu0 0
        %1340 = vmatpush1.bf16.msra.mxu0 %v1282
        %1341 = vmatprep.subr.bf16.mxu0 0
        %1342 = vmatpush1.bf16.msra.mxu0 %v1283
        %1343 = vmatprep.subr.bf16.mxu0 0
        %1344 = vmatpush1.bf16.msra.mxu0 %v1284
        %1345 = vmatprep.subr.bf16.mxu0 0
        %1346 = vmatpush1.bf16.msra.mxu0 %v1285
        %1347 = vmatprep.subr.bf16.mxu0 0
        %1348 = vmatpush1.bf16.msra.mxu0 %v1286
        %1349 = vmatprep.subr.bf16.mxu0 0
        %1350 = vmatpush1.bf16.msra.mxu0 %v1287
        %1351 = vmatprep.subr.bf16.mxu0 0
        %1352 = vmatpush1.bf16.msra.mxu0 %v1288
        %1353 = vmatprep.mubr.bf16.mxu0 %v626
        %1354 = vmatmul.mubr.bf16.gmra.mrb[0].mxu0 %v625
        %v1355 = vpop.f32.mrb[0].mxu0
        %v1356 = vadd.f32 %v1175, %v1355
        %v1357 = vpop.f32.mrb[0].mxu0
        %v1358 = vpop.f32.mrb[0].mxu0
        %v1359 = vadd.f32 %v1175, %v1358
        %v1360 = vpop.f32.mrb[0].mxu0
        %1361 = vmatprep.mubr.bf16.mxu0 %v629
        %1362 = vmatmul.mubr.bf16.gmra.mrb[0].mxu0 %v628
        %v1363 = vpop.f32.mrb[0].mxu0
        %v1364 = vadd.f32 %v1175, %v1363
        %v1365 = vpop.f32.mrb[0].mxu0
        %v1366 = vpop.f32.mrb[0].mxu0
        %v1367 = vadd.f32 %v1175, %v1366
        %v1368 = vpop.f32.mrb[0].mxu0
        %1369 = vmatprep.mubr.bf16.mxu0 %v632
        %1370 = vmatmul.mubr.bf16.gmra.mrb[0].mxu0 %v631
        %v1371 = vpop.f32.mrb[0].mxu0
        %v1372 = vadd.f32 %v1175, %v1371
        %v1373 = vpop.f32.mrb[0].mxu0
        %v1374 = vpop.f32.mrb[0].mxu0
        %v1375 = vadd.f32 %v1175, %v1374
        %v1376 = vpop.f32.mrb[0].mxu0
        %1377 = vmatprep.mubr.bf16.mxu0 %v635
        %1378 = vmatmul.mubr.bf16.gmra.mrb[0].mxu0 %v634
        %v1379 = vpop.f32.mrb[0].mxu0
        %v1380 = vadd.f32 %v1175, %v1379
        %v1381 = vpop.f32.mrb[0].mxu0
        %v1382 = vpop.f32.mrb[0].mxu0
        %v1383 = vadd.f32 %v1175, %v1382
        %v1384 = vpop.f32.mrb[0].mxu0
        %1385 = vmatprep.mubr.bf16.mxu0 %v638
        %1386 = vmatmul.mubr.bf16.gmra.mrb[0].mxu0 %v637
        %v1387 = vpop.f32.mrb[0].mxu0
        %v1388 = vadd.f32 %v1175, %v1387
        %v1389 = vpop.f32.mrb[0].mxu0
        %v1390 = vpop.f32.mrb[0].mxu0
        %v1391 = vadd.f32 %v1175, %v1390
        %v1392 = vpop.f32.mrb[0].mxu0
        %1393 = vmatprep.mubr.bf16.mxu0 %v641
        %1394 = vmatmul.mubr.bf16.gmra.mrb[0].mxu0 %v640
        %v1395 = vpop.f32.mrb[0].mxu0
        %v1396 = vadd.f32 %v1175, %v1395
        %v1397 = vpop.f32.mrb[0].mxu0
        %v1398 = vpop.f32.mrb[0].mxu0
        %v1399 = vadd.f32 %v1175, %v1398
        %v1400 = vpop.f32.mrb[0].mxu0
        %1401 = vmatprep.mubr.bf16.mxu0 %v644
        %1402 = vmatmul.mubr.bf16.gmra.mrb[0].mxu0 %v643
        %v1403 = vpop.f32.mrb[0].mxu0
        %v1404 = vadd.f32 %v1175, %v1403
        %v1405 = vpop.f32.mrb[0].mxu0
        %v1406 = vpop.f32.mrb[0].mxu0
        %v1407 = vadd.f32 %v1175, %v1406
        %v1408 = vpop.f32.mrb[0].mxu0
        %1409 = vmatprep.mubr.bf16.mxu0 %v647
        %1410 = vmatmul.mubr.bf16.gmra.mrb[0].mxu0 %v646
        %v1411 = vpop.f32.mrb[0].mxu0
        %v1412 = vadd.f32 %v1175, %v1411
        %v1413 = vpop.f32.mrb[0].mxu0
        %v1414 = vpop.f32.mrb[0].mxu0
        %v1415 = vadd.f32 %v1175, %v1414
        %v1416 = vpop.f32.mrb[0].mxu0
        %1417 = vdwg.mxu0
        %1418 = vmatprep.subr.bf16.mxu0 0
        %1419 = vmatpush1.bf16.msra.mxu0 %v1289
        %1420 = vmatprep.subr.bf16.mxu0 0
        %1421 = vmatpush1.bf16.msra.mxu0 %v1290
        %1422 = vmatprep.subr.bf16.mxu0 0
        %1423 = vmatpush1.bf16.msra.mxu0 %v1291
        %1424 = vmatprep.subr.bf16.mxu0 0
        %1425 = vmatpush1.bf16.msra.mxu0 %v1292
        %1426 = vmatprep.subr.bf16.mxu0 0
        %1427 = vmatpush1.bf16.msra.mxu0 %v1293
        %1428 = vmatprep.subr.bf16.mxu0 0
        %1429 = vmatpush1.bf16.msra.mxu0 %v1294
        %1430 = vmatprep.subr.bf16.mxu0 0
        %1431 = vmatpush1.bf16.msra.mxu0 %v1295
        %1432 = vmatprep.subr.bf16.mxu0 0
        %1433 = vmatpush1.bf16.msra.mxu0 %v1296
        %1434 = vmatprep.subr.bf16.mxu0 0
        %1435 = vmatpush1.bf16.msra.mxu0 0
        %1436 = vmatprep.subr.bf16.mxu0 0
        %1437 = vmatpush1.bf16.msra.mxu0 0
        %1438 = vmatprep.subr.bf16.mxu0 0
        %1439 = vmatpush1.bf16.msra.mxu0 0
        %1440 = vmatprep.subr.bf16.mxu0 0
        %1441 = vmatpush1.bf16.msra.mxu0 0
        %1442 = vmatprep.subr.bf16.mxu0 0
        %1443 = vmatpush1.bf16.msra.mxu0 0
        %1444 = vmatprep.subr.bf16.mxu0 0
        %1445 = vmatpush1.bf16.msra.mxu0 0
        %1446 = vmatprep.subr.bf16.mxu0 0
        %1447 = vmatpush1.bf16.msra.mxu0 0
        %1448 = vmatprep.subr.bf16.mxu0 0
        %1449 = vmatpush1.bf16.msra.mxu0 0
        %1450 = vmatprep.mubr.bf16.mxu0 0
        %1451 = vmatmul.mubr.bf16.gmra.mrb[0].mxu0 %v627
        %v1452 = vpop.f32.mrb[0].mxu0
        %v1453 = vadd.f32 %v1356, %v1452
        %v1454 = vpop.f32.mrb[0].mxu0
        %v1455 = vpop.f32.mrb[0].mxu0
        %v1456 = vadd.f32 %v1359, %v1455
        %v1457 = vpop.f32.mrb[0].mxu0
        %1458 = vmatprep.mubr.bf16.mxu0 0
        %1459 = vmatmul.mubr.bf16.gmra.mrb[0].mxu0 %v630
        %v1460 = vpop.f32.mrb[0].mxu0
        %v1461 = vadd.f32 %v1364, %v1460
        %v1462 = vpop.f32.mrb[0].mxu0
        %v1463 = vpop.f32.mrb[0].mxu0
        %v1464 = vadd.f32 %v1367, %v1463
        %v1465 = vpop.f32.mrb[0].mxu0
        %1466 = vmatprep.mubr.bf16.mxu0 0
        %1467 = vmatmul.mubr.bf16.gmra.mrb[0].mxu0 %v633
        %v1468 = vpop.f32.mrb[0].mxu0
        %v1469 = vadd.f32 %v1372, %v1468
        %v1470 = vpop.f32.mrb[0].mxu0
        %v1471 = vpop.f32.mrb[0].mxu0
        %v1472 = vadd.f32 %v1375, %v1471
        %v1473 = vpop.f32.mrb[0].mxu0
        %1474 = vmatprep.mubr.bf16.mxu0 0
        %1475 = vmatmul.mubr.bf16.gmra.mrb[0].mxu0 %v636
        %v1476 = vpop.f32.mrb[0].mxu0
        %v1477 = vadd.f32 %v1380, %v1476
        %v1478 = vpop.f32.mrb[0].mxu0
        %v1479 = vpop.f32.mrb[0].mxu0
        %v1480 = vadd.f32 %v1383, %v1479
        %v1481 = vpop.f32.mrb[0].mxu0
        %1482 = vmatprep.mubr.bf16.mxu0 0
        %1483 = vmatmul.mubr.bf16.gmra.mrb[0].mxu0 %v639
        %v1484 = vpop.f32.mrb[0].mxu0
        %v1485 = vadd.f32 %v1388, %v1484
        %v1486 = vpop.f32.mrb[0].mxu0
        %v1487 = vpop.f32.mrb[0].mxu0
        %v1488 = vadd.f32 %v1391, %v1487
        %v1489 = vpop.f32.mrb[0].mxu0
        %1490 = vmatprep.mubr.bf16.mxu0 0
        %1491 = vmatmul.mubr.bf16.gmra.mrb[0].mxu0 %v642
        %v1492 = vpop.f32.mrb[0].mxu0
        %v1493 = vadd.f32 %v1396, %v1492
        %v1494 = vpop.f32.mrb[0].mxu0
        %v1495 = vpop.f32.mrb[0].mxu0
        %v1496 = vadd.f32 %v1399, %v1495
        %v1497 = vpop.f32.mrb[0].mxu0
        %1498 = vmatprep.mubr.bf16.mxu0 0
        %1499 = vmatmul.mubr.bf16.gmra.mrb[0].mxu0 %v645
        %v1500 = vpop.f32.mrb[0].mxu0
        %v1501 = vadd.f32 %v1404, %v1500
        %v1502 = vpop.f32.mrb[0].mxu0
        %v1503 = vpop.f32.mrb[0].mxu0
        %v1504 = vadd.f32 %v1407, %v1503
        %v1505 = vpop.f32.mrb[0].mxu0
        %1506 = vmatprep.mubr.bf16.mxu0 0
        %1507 = vmatmul.mubr.bf16.gmra.mrb[0].mxu0 %v648
        %v1508 = vpop.f32.mrb[0].mxu0
        %v1509 = vadd.f32 %v1412, %v1508
        %v1510 = vpop.f32.mrb[0].mxu0
        %v1511 = vpop.f32.mrb[0].mxu0
        %v1512 = vadd.f32 %v1415, %v1511
        %v1513 = vpop.f32.mrb[0].mxu0
        %1514 = vdwg.mxu0
        %v1515 = vld [vmem:[%s429] sm:$0x1]
        %v1517 = vlaneseq
        %v1518 = vshrl.u32 %v1517, 7
        %v1519 = vsub.s32 0, %v1518
        %v1520 = vrot.slane %v1515, %v1519
        %v1522 = vmul.f32 %v1453, %v1520
        %v1523 = vmul.f32 %v1456, %v1520
        %v1524 = vmul.f32 %v1461, %v1520
        %v1525 = vmul.f32 %v1464, %v1520
        %v1526 = vmul.f32 %v1469, %v1520
        %v1527 = vmul.f32 %v1472, %v1520
        %v1528 = vmul.f32 %v1477, %v1520
        %v1529 = vmul.f32 %v1480, %v1520
        %v1530 = vmul.f32 %v1485, %v1520
        %v1531 = vmul.f32 %v1488, %v1520
        %v1532 = vmul.f32 %v1493, %v1520
        %v1533 = vmul.f32 %v1496, %v1520
        %v1534 = vmul.f32 %v1501, %v1520
        %v1535 = vmul.f32 %v1504, %v1520
        %v1536 = vmul.f32 %v1509, %v1520
        %v1537 = vmul.f32 %v1512, %v1520
        %v1538 = vadd.f32 %v1108, %v1522
        %v1539 = vadd.f32 %v1111, %v1523
        %v1540 = vadd.f32 %v1116, %v1524
        %v1541 = vadd.f32 %v1119, %v1525
        %v1542 = vadd.f32 %v1124, %v1526
        %v1543 = vadd.f32 %v1127, %v1527
        %v1544 = vadd.f32 %v1132, %v1528
        %v1545 = vadd.f32 %v1135, %v1529
        %v1546 = vadd.f32 %v1140, %v1530
        %v1547 = vadd.f32 %v1143, %v1531
        %v1548 = vadd.f32 %v1148, %v1532
        %v1549 = vadd.f32 %v1151, %v1533
        %v1550 = vadd.f32 %v1156, %v1534
        %v1551 = vadd.f32 %v1159, %v1535
        %v1552 = vadd.f32 %v1164, %v1536
        %v1553 = vadd.f32 %v1167, %v1537
        %1554 = vst [vmem:[%s419] sm:$0xff] %v1538
        %1555 = vst [vmem:[%s419 + $0x8] sm:$0xff] %v1539
        %1556 = vst [vmem:[%s419 + $0x10] sm:$0xff] %v1540
        %1557 = vst [vmem:[%s419 + $0x18] sm:$0xff] %v1541
        %1558 = vst [vmem:[%s419 + $0x20] sm:$0xff] %v1542
        %1559 = vst [vmem:[%s419 + $0x28] sm:$0xff] %v1543
        %1560 = vst [vmem:[%s419 + $0x30] sm:$0xff] %v1544
        %1561 = vst [vmem:[%s419 + $0x38] sm:$0xff] %v1545
        %1562 = vst [vmem:[%s419 + $0x40] sm:$0xff] %v1546
        %1563 = vst [vmem:[%s419 + $0x48] sm:$0xff] %v1547
        %1564 = vst [vmem:[%s419 + $0x50] sm:$0xff] %v1548
        %1565 = vst [vmem:[%s419 + $0x58] sm:$0xff] %v1549
        %1566 = vst [vmem:[%s419 + $0x60] sm:$0xff] %v1550
        %1567 = vst [vmem:[%s419 + $0x68] sm:$0xff] %v1551
        %1568 = vst [vmem:[%s419 + $0x70] sm:$0xff] %v1552
        %1569 = vst [vmem:[%s419 + $0x78] sm:$0xff] %v1553
        %s1570 = sand.u32 %s226, 1
        %s1571 = scalar_lea.sflag [#allocation4], %s1570
        %s1572 = sand.u32 %s226, 1
        %s1573 = smul.addr %s1572, 128
        %s1574 = scalar_lea.vmem [#allocation8], %s1573
        // Predicated region
        $region61: #{tpu_custom_call.1} parent=47 // pred_check
          %p1575 = pneg %p236
        $region62: #{tpu_custom_call.1} parent=47 // pred_check_branch
          %1577 = sbr.rel (%p1575) target = $region64
        $region63: #{tpu_custom_call.1} parent=47 // pred_region
          %s1578 = smul.u32 16, %s31
          %s1580 = ssub.s32 2048, 2048
          %1581 = vsyncadd %s1571, %s1580
          %s1582 = smul.addr %s1578, 2
          %s1583 = sadd.s32 %s32, %s1582
          %s1584 = smul.addr %s1583, 128
          %s1585 = scalar_lea.hbm %s7, %s1584
          %s1586 = sshll.u32 %s1574, 4
          %s1587 = int_to_ptr.vmem [resolvable:$true] %s1586
          %1592 = dma.vmem_to_hbm [thread:$0]  %s1587, 2048, %s1585, %s1571, 128, 256, 8
        $region64: #{tpu_custom_call.1} parent=47 // pred_fallthru
          _
      $region48: #{tpu_custom_call.1} parent=5 // pred_fallthru
        _
      %p1593 = scmp.le.s32.totalorder 2, %s22
      // Predicated region
      $region65: #{tpu_custom_call.1} parent=5 // pred_check
        %p1594 = pneg %p1593
      $region66: #{tpu_custom_call.1} parent=5 // pred_check_branch
        %1596 = sbr.rel (%p1594) target = $region68
      $region67: #{tpu_custom_call.1} parent=5 // pred_region
        %s1597 = ssub.s32 %s22, 2
        // Predicated region
        $region69: #{tpu_custom_call.1} parent=67 // pred_check
          %p1598 = pneg %p242
        $region70: #{tpu_custom_call.1} parent=67 // pred_check_branch
          %1600 = sbr.rel (%p1598) target = $region72
        $region71: #{tpu_custom_call.1} parent=67 // pred_region
          %s1601 = sand.u32 %s227, 1
          %s1602 = scalar_lea.sflag [#allocation4], %s1601
          %s1603 = sand.u32 %s227, 1
          %s1604 = smul.addr %s1603, 128
          %s1605 = scalar_lea.vmem [#allocation8], %s1604
          %1606 = dma.done %s1602, 2048
        $region72: #{tpu_custom_call.1} parent=67 // pred_fallthru
          _
      $region68: #{tpu_custom_call.1} parent=5 // pred_fallthru
        _
    $region6: #{tpu_custom_call.1} parent=1 // loop_footer
      %s26 = sadd.s32 1, %s22
    $region7: #{tpu_custom_call.1} parent=1 // loop_footer_branch
      %21 = sbr.rel target = $region3
    $region8: #{tpu_custom_call.1} parent=1 // loop_exit
      _
    %1607 = vsyncpa [#allocation3], 1
    %s1608 = scalar_lea.sflag [#allocation3], 1
    %1609 = vsyncpa %s1608, 1
    %1610 = vsyncpa [#allocation6], 1
    %s1611 = scalar_lea.sflag [#allocation6], 1
    %1612 = vsyncpa %s1611, 1
    %1613 = vsyncpa [#allocation4], 1
    %s1614 = scalar_lea.sflag [#allocation4], 1
    %1615 = vsyncpa %s1614, 1

</llo_original>
